<compile_context>
chip_gen: v7x
topology: tpu7x:2x2x1
jax: 0.10.0
libtpu: 0.0.40
codegen_flags: <defaults>
</compile_context>

<pallas_src>
import functools

import jax
import jax.numpy as jnp
from jax import lax
from jax.experimental import pallas as pl
from jax.experimental.pallas import tpu as pltpu


def _positional_kernel(x_ref, w_ref, b_ref, o_ref, xp_ref, *, H, W, BC, KH, KW, PAD):
    """One (image, channel-block): depthwise 3x3 conv + bias -> sigmoid -> x * gate."""
    c0 = pl.program_id(1) * BC
    taps = KH * KW

    # In-kernel zero padding: zero the VMEM scratch, then write the interior.
    xp_ref[...] = jnp.zeros_like(xp_ref)
    xp_ref[:, PAD:PAD + H, PAD:PAD + W] = x_ref[0]

    def per_channel(cc, carry):
        c = c0 + cc                                        # global channel index
        acc = jnp.zeros((H, W), jnp.float32)
        for ky in range(KH):                               # static 3x3 tap loop
            for kx in range(KW):
                wk = w_ref[c * taps + ky * KW + kx]        # scalar weight from SMEM
                acc = acc + wk * xp_ref[cc, ky:ky + H, kx:kx + W]
        acc = acc + b_ref[c]                               # conv bias (SMEM scalar)
        gate = 1.0 / (1.0 + jnp.exp(-acc))                 # sigmoid (exp on the EUP)
        o_ref[0, cc] = (x_ref[0, cc] * gate).astype(o_ref.dtype)
        return carry

    lax.fori_loop(0, BC, per_channel, 0, unroll=True)


def positional_forward(x_nchw, w_oihw, bias, *, pad=1):
    """Positional.forward: x * sigmoid(Conv2d(dim, dim, 3, padding=1, groups=dim)(x))."""
    N, C, H, W = x_nchw.shape
    Cw, cin_per_group, KH, KW = w_oihw.shape
    assert Cw == C and cin_per_group == 1, "depthwise conv (groups=dim) expected"
    assert KH == 3 and KW == 3 and pad == 1  # TODO(synk): generalize kernel size / padding

    # Channel block per grid step: largest divisor of C that is <= 8
    # (bounds the in-kernel unroll / live ranges).
    BC = 1
    for d in (8, 4, 2, 1):
        if C % d == 0:
            BC = d
            break

    x = x_nchw.astype(jnp.float32)
    w_flat = w_oihw.astype(jnp.float32).reshape(C * KH * KW)   # SMEM scalar table
    b_flat = bias.astype(jnp.float32)                          # SMEM scalar table

    kernel = functools.partial(_positional_kernel, H=H, W=W, BC=BC, KH=KH, KW=KW, PAD=pad)

    return pl.pallas_call(
        kernel,
        out_shape=jax.ShapeDtypeStruct((N, C, H, W), x.dtype),
        grid_spec=pltpu.PrefetchScalarGridSpec(
            num_scalar_prefetch=0,
            grid=(N, C // BC),
            in_specs=[
                pl.BlockSpec((1, BC, H, W), lambda n, cb: (n, cb, 0, 0)),
                pl.BlockSpec(memory_space=pltpu.MemorySpace.SMEM),   # weights (C*9,)
                pl.BlockSpec(memory_space=pltpu.MemorySpace.SMEM),   # bias (C,)
            ],
            out_specs=pl.BlockSpec((1, BC, H, W), lambda n, cb: (n, cb, 0, 0)),
            scratch_shapes=[pltpu.VMEM((BC, H + 2 * pad, W + 2 * pad), jnp.float32)],
        ),
        compiler_params=pltpu.CompilerParams(
            dimension_semantics=("parallel", "parallel")),
    )(x, w_flat, b_flat)


def _reference(x, w, b):
    C = x.shape[1]
    conv = lax.conv_general_dilated(
        x, w, window_strides=(1, 1), padding=((1, 1), (1, 1)),
        dimension_numbers=("NCHW", "OIHW", "NCHW"), feature_group_count=C)
    conv = conv + b[None, :, None, None]
    return x * jax.nn.sigmoid(conv)


if __name__ == "__main__":
    # Small shapes: batch=2, dim=4 channels, spatial 16x16.
    N, C, H, W = 2, 4, 16, 16
    KH = KW = 3

    key = jax.random.PRNGKey(0)
    kx_, kw_, kb_ = jax.random.split(key, 3)
    x = jax.random.normal(kx_, (N, C, H, W), dtype=jnp.float32)
    w = 0.2 * jax.random.normal(kw_, (C, 1, KH, KW), dtype=jnp.float32)   # depthwise weight
    b = 0.1 * jax.random.normal(kb_, (C,), dtype=jnp.float32)             # conv bias

    out = positional_forward(x, w, b)
    out = jax.block_until_ready(out)

    ref = _reference(x, w, b)
    assert out.shape == (N, C, H, W), out.shape
    assert jnp.allclose(out, ref, atol=1e-3, rtol=1e-3), \
        float(jnp.max(jnp.abs(out - ref)))

    print("KERNEL_OK")
</pallas_src>

<mosaic_0001>
module attributes {stable_mosaic.version = 11 : i64} {
  func.func @_positional_kernel(%arg0: i32, %arg1: i32, %arg2: memref<1x4x16x16xf32, #tpu.memory_space<vmem>>, %arg3: memref<36xf32, #tpu.memory_space<smem>>, %arg4: memref<4xf32, #tpu.memory_space<smem>>, %arg5: memref<1x4x16x16xf32, #tpu.memory_space<vmem>>, %arg6: memref<4x18x18xf32, #tpu.memory_space<vmem>>) attributes {dimension_semantics = [#tpu.dimension_semantics<parallel>, #tpu.dimension_semantics<parallel>], iteration_bounds = array<i64: 2, 1>, scalar_prefetch = 0 : i64, scratch_operands = 1 : i64, tpu.core_type = #tpu.core_type<tc>, window_params = [{transform_indices = @transform_0, window_bounds = array<i64: 1, 4, 16, 16>}, {transform_indices = @transform_1, window_bounds = array<i64: 36>}, {transform_indices = @transform_2, window_bounds = array<i64: 4>}, {transform_indices = @transform_3, window_bounds = array<i64: 1, 4, 16, 16>}]} {
    %c4_i32 = arith.constant 4 : i32
    %0 = arith.muli %arg1, %c4_i32 : i32
    %cst = arith.constant 0.000000e+00 : f32
    %1 = vector.broadcast %cst : f32 to vector<4x18x18xf32>
    %c0 = arith.constant 0 : index
    %c0_0 = arith.constant 0 : index
    %c0_1 = arith.constant 0 : index
    %2 = vector.load %arg6[%c0, %c0_0, %c0_1] : memref<4x18x18xf32, #tpu.memory_space<vmem>>, vector<4x18x18xf32>
    tpu.vector_store %arg6[%c0, %c0_0, %c0_1], %1 {strides = array<i32>} : memref<4x18x18xf32, #tpu.memory_space<vmem>>, vector<4x18x18xf32>,
    %c0_2 = arith.constant 0 : index
    %c0_3 = arith.constant 0 : index
    %c0_4 = arith.constant 0 : index
    %c0_5 = arith.constant 0 : index
    %3 = vector.load %arg2[%c0_2, %c0_3, %c0_4, %c0_5] : memref<1x4x16x16xf32, #tpu.memory_space<vmem>>, vector<1x4x16x16xf32>
    %4 = vector.shape_cast %3 : vector<1x4x16x16xf32> to vector<4x16x16xf32>
    %c0_6 = arith.constant 0 : index
    %c1 = arith.constant 1 : index
    %c1_7 = arith.constant 1 : index
    %5 = vector.load %arg6[%c0_6, %c1, %c1_7] : memref<4x18x18xf32, #tpu.memory_space<vmem>>, vector<4x16x16xf32>
    tpu.vector_store %arg6[%c0_6, %c1, %c1_7], %4 {strides = array<i32>} : memref<4x18x18xf32, #tpu.memory_space<vmem>>, vector<4x16x16xf32>,
    %c0_i32 = arith.constant 0 : i32
    %6 = arith.addi %0, %c0_i32 : i32
    %cst_8 = arith.constant 0.000000e+00 : f32
    %7 = vector.broadcast %cst_8 : f32 to vector<16x16xf32>
    %c9_i32 = arith.constant 9 : i32
    %8 = arith.muli %6, %c9_i32 : i32
    %c0_i32_9 = arith.constant 0 : i32
    %9 = arith.addi %8, %c0_i32_9 : i32
    %c0_i32_10 = arith.constant 0 : i32
    %10 = arith.addi %9, %c0_i32_10 : i32
    %11 = arith.index_cast %10 : i32 to index
    %12 = memref.load %arg3[%11] : memref<36xf32, #tpu.memory_space<smem>>
    %13 = arith.index_cast %c0_i32 : i32 to index
    %c0_11 = arith.constant 0 : index
    %c0_12 = arith.constant 0 : index
    %14 = vector.load %arg6[%13, %c0_11, %c0_12] : memref<4x18x18xf32, #tpu.memory_space<vmem>>, vector<1x16x16xf32>
    %15 = vector.shape_cast %14 : vector<1x16x16xf32> to vector<16x16xf32>
    %16 = vector.broadcast %12 : f32 to vector<16x16xf32>
    %17 = arith.mulf %16, %15 : vector<16x16xf32>
    %18 = arith.addf %7, %17 : vector<16x16xf32>
    %c9_i32_13 = arith.constant 9 : i32
    %19 = arith.muli %6, %c9_i32_13 : i32
    %c0_i32_14 = arith.constant 0 : i32
    %20 = arith.addi %19, %c0_i32_14 : i32
    %c1_i32 = arith.constant 1 : i32
    %21 = arith.addi %20, %c1_i32 : i32
    %22 = arith.index_cast %21 : i32 to index
    %23 = memref.load %arg3[%22] : memref<36xf32, #tpu.memory_space<smem>>
    %24 = arith.index_cast %c0_i32 : i32 to index
    %c0_15 = arith.constant 0 : index
    %c1_16 = arith.constant 1 : index
    %25 = vector.load %arg6[%24, %c0_15, %c1_16] : memref<4x18x18xf32, #tpu.memory_space<vmem>>, vector<1x16x16xf32>
    %26 = vector.shape_cast %25 : vector<1x16x16xf32> to vector<16x16xf32>
    %27 = vector.broadcast %23 : f32 to vector<16x16xf32>
    %28 = arith.mulf %27, %26 : vector<16x16xf32>
    %29 = arith.addf %18, %28 : vector<16x16xf32>
    %c9_i32_17 = arith.constant 9 : i32
    %30 = arith.muli %6, %c9_i32_17 : i32
    %c0_i32_18 = arith.constant 0 : i32
    %31 = arith.addi %30, %c0_i32_18 : i32
    %c2_i32 = arith.constant 2 : i32
    %32 = arith.addi %31, %c2_i32 : i32
    %33 = arith.index_cast %32 : i32 to index
    %34 = memref.load %arg3[%33] : memref<36xf32, #tpu.memory_space<smem>>
    %35 = arith.index_cast %c0_i32 : i32 to index
    %c0_19 = arith.constant 0 : index
    %c2 = arith.constant 2 : index
    %36 = vector.load %arg6[%35, %c0_19, %c2] : memref<4x18x18xf32, #tpu.memory_space<vmem>>, vector<1x16x16xf32>
    %37 = vector.shape_cast %36 : vector<1x16x16xf32> to vector<16x16xf32>
    %38 = vector.broadcast %34 : f32 to vector<16x16xf32>
    %39 = arith.mulf %38, %37 : vector<16x16xf32>
    %40 = arith.addf %29, %39 : vector<16x16xf32>
    %c9_i32_20 = arith.constant 9 : i32
    %41 = arith.muli %6, %c9_i32_20 : i32
    %c3_i32 = arith.constant 3 : i32
    %42 = arith.addi %41, %c3_i32 : i32
    %c0_i32_21 = arith.constant 0 : i32
    %43 = arith.addi %42, %c0_i32_21 : i32
    %44 = arith.index_cast %43 : i32 to index
    %45 = memref.load %arg3[%44] : memref<36xf32, #tpu.memory_space<smem>>
    %46 = arith.index_cast %c0_i32 : i32 to index
    %c1_22 = arith.constant 1 : index
    %c0_23 = arith.constant 0 : index
    %47 = vector.load %arg6[%46, %c1_22, %c0_23] : memref<4x18x18xf32, #tpu.memory_space<vmem>>, vector<1x16x16xf32>
    %48 = vector.shape_cast %47 : vector<1x16x16xf32> to vector<16x16xf32>
    %49 = vector.broadcast %45 : f32 to vector<16x16xf32>
    %50 = arith.mulf %49, %48 : vector<16x16xf32>
    %51 = arith.addf %40, %50 : vector<16x16xf32>
    %c9_i32_24 = arith.constant 9 : i32
    %52 = arith.muli %6, %c9_i32_24 : i32
    %c3_i32_25 = arith.constant 3 : i32
    %53 = arith.addi %52, %c3_i32_25 : i32
    %c1_i32_26 = arith.constant 1 : i32
    %54 = arith.addi %53, %c1_i32_26 : i32
    %55 = arith.index_cast %54 : i32 to index
    %56 = memref.load %arg3[%55] : memref<36xf32, #tpu.memory_space<smem>>
    %57 = arith.index_cast %c0_i32 : i32 to index
    %c1_27 = arith.constant 1 : index
    %c1_28 = arith.constant 1 : index
    %58 = vector.load %arg6[%57, %c1_27, %c1_28] : memref<4x18x18xf32, #tpu.memory_space<vmem>>, vector<1x16x16xf32>
    %59 = vector.shape_cast %58 : vector<1x16x16xf32> to vector<16x16xf32>
    %60 = vector.broadcast %56 : f32 to vector<16x16xf32>
    %61 = arith.mulf %60, %59 : vector<16x16xf32>
    %62 = arith.addf %51, %61 : vector<16x16xf32>
    %c9_i32_29 = arith.constant 9 : i32
    %63 = arith.muli %6, %c9_i32_29 : i32
    %c3_i32_30 = arith.constant 3 : i32
    %64 = arith.addi %63, %c3_i32_30 : i32
    %c2_i32_31 = arith.constant 2 : i32
    %65 = arith.addi %64, %c2_i32_31 : i32
    %66 = arith.index_cast %65 : i32 to index
    %67 = memref.load %arg3[%66] : memref<36xf32, #tpu.memory_space<smem>>
    %68 = arith.index_cast %c0_i32 : i32 to index
    %c1_32 = arith.constant 1 : index
    %c2_33 = arith.constant 2 : index
    %69 = vector.load %arg6[%68, %c1_32, %c2_33] : memref<4x18x18xf32, #tpu.memory_space<vmem>>, vector<1x16x16xf32>
    %70 = vector.shape_cast %69 : vector<1x16x16xf32> to vector<16x16xf32>
    %71 = vector.broadcast %67 : f32 to vector<16x16xf32>
    %72 = arith.mulf %71, %70 : vector<16x16xf32>
    %73 = arith.addf %62, %72 : vector<16x16xf32>
    %c9_i32_34 = arith.constant 9 : i32
    %74 = arith.muli %6, %c9_i32_34 : i32
    %c6_i32 = arith.constant 6 : i32
    %75 = arith.addi %74, %c6_i32 : i32
    %c0_i32_35 = arith.constant 0 : i32
    %76 = arith.addi %75, %c0_i32_35 : i32
    %77 = arith.index_cast %76 : i32 to index
    %78 = memref.load %arg3[%77] : memref<36xf32, #tpu.memory_space<smem>>
    %79 = arith.index_cast %c0_i32 : i32 to index
    %c2_36 = arith.constant 2 : index
    %c0_37 = arith.constant 0 : index
    %80 = vector.load %arg6[%79, %c2_36, %c0_37] : memref<4x18x18xf32, #tpu.memory_space<vmem>>, vector<1x16x16xf32>
    %81 = vector.shape_cast %80 : vector<1x16x16xf32> to vector<16x16xf32>
    %82 = vector.broadcast %78 : f32 to vector<16x16xf32>
    %83 = arith.mulf %82, %81 : vector<16x16xf32>
    %84 = arith.addf %73, %83 : vector<16x16xf32>
    %c9_i32_38 = arith.constant 9 : i32
    %85 = arith.muli %6, %c9_i32_38 : i32
    %c6_i32_39 = arith.constant 6 : i32
    %86 = arith.addi %85, %c6_i32_39 : i32
    %c1_i32_40 = arith.constant 1 : i32
    %87 = arith.addi %86, %c1_i32_40 : i32
    %88 = arith.index_cast %87 : i32 to index
    %89 = memref.load %arg3[%88] : memref<36xf32, #tpu.memory_space<smem>>
    %90 = arith.index_cast %c0_i32 : i32 to index
    %c2_41 = arith.constant 2 : index
    %c1_42 = arith.constant 1 : index
    %91 = vector.load %arg6[%90, %c2_41, %c1_42] : memref<4x18x18xf32, #tpu.memory_space<vmem>>, vector<1x16x16xf32>
    %92 = vector.shape_cast %91 : vector<1x16x16xf32> to vector<16x16xf32>
    %93 = vector.broadcast %89 : f32 to vector<16x16xf32>
    %94 = arith.mulf %93, %92 : vector<16x16xf32>
    %95 = arith.addf %84, %94 : vector<16x16xf32>
    %c9_i32_43 = arith.constant 9 : i32
    %96 = arith.muli %6, %c9_i32_43 : i32
    %c6_i32_44 = arith.constant 6 : i32
    %97 = arith.addi %96, %c6_i32_44 : i32
    %c2_i32_45 = arith.constant 2 : i32
    %98 = arith.addi %97, %c2_i32_45 : i32
    %99 = arith.index_cast %98 : i32 to index
    %100 = memref.load %arg3[%99] : memref<36xf32, #tpu.memory_space<smem>>
    %101 = arith.index_cast %c0_i32 : i32 to index
    %c2_46 = arith.constant 2 : index
    %c2_47 = arith.constant 2 : index
    %102 = vector.load %arg6[%101, %c2_46, %c2_47] : memref<4x18x18xf32, #tpu.memory_space<vmem>>, vector<1x16x16xf32>
    %103 = vector.shape_cast %102 : vector<1x16x16xf32> to vector<16x16xf32>
    %104 = vector.broadcast %100 : f32 to vector<16x16xf32>
    %105 = arith.mulf %104, %103 : vector<16x16xf32>
    %106 = arith.addf %95, %105 : vector<16x16xf32>
    %107 = arith.index_cast %6 : i32 to index
    %108 = memref.load %arg4[%107] : memref<4xf32, #tpu.memory_space<smem>>
    %109 = vector.broadcast %108 : f32 to vector<16x16xf32>
    %110 = arith.addf %106, %109 : vector<16x16xf32>
    %cst_48 = arith.constant 0.000000e+00 : f32
    %111 = vector.broadcast %cst_48 : f32 to vector<16x16xf32>
    %112 = arith.subf %111, %110 : vector<16x16xf32>
    %113 = math.exp %112 : vector<16x16xf32>
    %cst_49 = arith.constant 1.000000e+00 : f32
    %114 = vector.broadcast %cst_49 : f32 to vector<16x16xf32>
    %115 = arith.addf %114, %113 : vector<16x16xf32>
    %cst_50 = arith.constant 1.000000e+00 : f32
    %116 = vector.broadcast %cst_50 : f32 to vector<16x16xf32>
    %117 = arith.divf %116, %115 : vector<16x16xf32>
    %c0_51 = arith.constant 0 : index
    %118 = arith.index_cast %c0_i32 : i32 to index
    %c0_52 = arith.constant 0 : index
    %c0_53 = arith.constant 0 : index
    %119 = vector.load %arg2[%c0_51, %118, %c0_52, %c0_53] : memref<1x4x16x16xf32, #tpu.memory_space<vmem>>, vector<1x1x16x16xf32>
    %120 = vector.shape_cast %119 : vector<1x1x16x16xf32> to vector<16x16xf32>
    %121 = arith.mulf %120, %117 : vector<16x16xf32>
    %c0_54 = arith.constant 0 : index
    %122 = arith.index_cast %c0_i32 : i32 to index
    %c0_55 = arith.constant 0 : index
    %c0_56 = arith.constant 0 : index
    %123 = vector.load %arg5[%c0_54, %122, %c0_55, %c0_56] : memref<1x4x16x16xf32, #tpu.memory_space<vmem>>, vector<1x1x16x16xf32>
    %124 = vector.shape_cast %123 : vector<1x1x16x16xf32> to vector<16x16xf32>
    %125 = vector.shape_cast %121 : vector<16x16xf32> to vector<1x1x16x16xf32>
    tpu.vector_store %arg5[%c0_54, %122, %c0_55, %c0_56], %125 {strides = array<i32>} : memref<1x4x16x16xf32, #tpu.memory_space<vmem>>, vector<1x1x16x16xf32>,
    %c1_i32_57 = arith.constant 1 : i32
    %126 = arith.addi %0, %c1_i32_57 : i32
    %cst_58 = arith.constant 0.000000e+00 : f32
    %127 = vector.broadcast %cst_58 : f32 to vector<16x16xf32>
    %c9_i32_59 = arith.constant 9 : i32
    %128 = arith.muli %126, %c9_i32_59 : i32
    %c0_i32_60 = arith.constant 0 : i32
    %129 = arith.addi %128, %c0_i32_60 : i32
    %c0_i32_61 = arith.constant 0 : i32
    %130 = arith.addi %129, %c0_i32_61 : i32
    %131 = arith.index_cast %130 : i32 to index
    %132 = memref.load %arg3[%131] : memref<36xf32, #tpu.memory_space<smem>>
    %133 = arith.index_cast %c1_i32_57 : i32 to index
    %c0_62 = arith.constant 0 : index
    %c0_63 = arith.constant 0 : index
    %134 = vector.load %arg6[%133, %c0_62, %c0_63] : memref<4x18x18xf32, #tpu.memory_space<vmem>>, vector<1x16x16xf32>
    %135 = vector.shape_cast %134 : vector<1x16x16xf32> to vector<16x16xf32>
    %136 = vector.broadcast %132 : f32 to vector<16x16xf32>
    %137 = arith.mulf %136, %135 : vector<16x16xf32>
    %138 = arith.addf %127, %137 : vector<16x16xf32>
    %c9_i32_64 = arith.constant 9 : i32
    %139 = arith.muli %126, %c9_i32_64 : i32
    %c0_i32_65 = arith.constant 0 : i32
    %140 = arith.addi %139, %c0_i32_65 : i32
    %c1_i32_66 = arith.constant 1 : i32
    %141 = arith.addi %140, %c1_i32_66 : i32
    %142 = arith.index_cast %141 : i32 to index
    %143 = memref.load %arg3[%142] : memref<36xf32, #tpu.memory_space<smem>>
    %144 = arith.index_cast %c1_i32_57 : i32 to index
    %c0_67 = arith.constant 0 : index
    %c1_68 = arith.constant 1 : index
    %145 = vector.load %arg6[%144, %c0_67, %c1_68] : memref<4x18x18xf32, #tpu.memory_space<vmem>>, vector<1x16x16xf32>
    %146 = vector.shape_cast %145 : vector<1x16x16xf32> to vector<16x16xf32>
    %147 = vector.broadcast %143 : f32 to vector<16x16xf32>
    %148 = arith.mulf %147, %146 : vector<16x16xf32>
    %149 = arith.addf %138, %148 : vector<16x16xf32>
    %c9_i32_69 = arith.constant 9 : i32
    %150 = arith.muli %126, %c9_i32_69 : i32
    %c0_i32_70 = arith.constant 0 : i32
    %151 = arith.addi %150, %c0_i32_70 : i32
    %c2_i32_71 = arith.constant 2 : i32
    %152 = arith.addi %151, %c2_i32_71 : i32
    %153 = arith.index_cast %152 : i32 to index
    %154 = memref.load %arg3[%153] : memref<36xf32, #tpu.memory_space<smem>>
    %155 = arith.index_cast %c1_i32_57 : i32 to index
    %c0_72 = arith.constant 0 : index
    %c2_73 = arith.constant 2 : index
    %156 = vector.load %arg6[%155, %c0_72, %c2_73] : memref<4x18x18xf32, #tpu.memory_space<vmem>>, vector<1x16x16xf32>
    %157 = vector.shape_cast %156 : vector<1x16x16xf32> to vector<16x16xf32>
    %158 = vector.broadcast %154 : f32 to vector<16x16xf32>
    %159 = arith.mulf %158, %157 : vector<16x16xf32>
    %160 = arith.addf %149, %159 : vector<16x16xf32>
    %c9_i32_74 = arith.constant 9 : i32
    %161 = arith.muli %126, %c9_i32_74 : i32
    %c3_i32_75 = arith.constant 3 : i32
    %162 = arith.addi %161, %c3_i32_75 : i32
    %c0_i32_76 = arith.constant 0 : i32
    %163 = arith.addi %162, %c0_i32_76 : i32
    %164 = arith.index_cast %163 : i32 to index
    %165 = memref.load %arg3[%164] : memref<36xf32, #tpu.memory_space<smem>>
    %166 = arith.index_cast %c1_i32_57 : i32 to index
    %c1_77 = arith.constant 1 : index
    %c0_78 = arith.constant 0 : index
    %167 = vector.load %arg6[%166, %c1_77, %c0_78] : memref<4x18x18xf32, #tpu.memory_space<vmem>>, vector<1x16x16xf32>
    %168 = vector.shape_cast %167 : vector<1x16x16xf32> to vector<16x16xf32>
    %169 = vector.broadcast %165 : f32 to vector<16x16xf32>
    %170 = arith.mulf %169, %168 : vector<16x16xf32>
    %171 = arith.addf %160, %170 : vector<16x16xf32>
    %c9_i32_79 = arith.constant 9 : i32
    %172 = arith.muli %126, %c9_i32_79 : i32
    %c3_i32_80 = arith.constant 3 : i32
    %173 = arith.addi %172, %c3_i32_80 : i32
    %c1_i32_81 = arith.constant 1 : i32
    %174 = arith.addi %173, %c1_i32_81 : i32
    %175 = arith.index_cast %174 : i32 to index
    %176 = memref.load %arg3[%175] : memref<36xf32, #tpu.memory_space<smem>>
    %177 = arith.index_cast %c1_i32_57 : i32 to index
    %c1_82 = arith.constant 1 : index
    %c1_83 = arith.constant 1 : index
    %178 = vector.load %arg6[%177, %c1_82, %c1_83] : memref<4x18x18xf32, #tpu.memory_space<vmem>>, vector<1x16x16xf32>
    %179 = vector.shape_cast %178 : vector<1x16x16xf32> to vector<16x16xf32>
    %180 = vector.broadcast %176 : f32 to vector<16x16xf32>
    %181 = arith.mulf %180, %179 : vector<16x16xf32>
    %182 = arith.addf %171, %181 : vector<16x16xf32>
    %c9_i32_84 = arith.constant 9 : i32
    %183 = arith.muli %126, %c9_i32_84 : i32
    %c3_i32_85 = arith.constant 3 : i32
    %184 = arith.addi %183, %c3_i32_85 : i32
    %c2_i32_86 = arith.constant 2 : i32
    %185 = arith.addi %184, %c2_i32_86 : i32
    %186 = arith.index_cast %185 : i32 to index
    %187 = memref.load %arg3[%186] : memref<36xf32, #tpu.memory_space<smem>>
    %188 = arith.index_cast %c1_i32_57 : i32 to index
    %c1_87 = arith.constant 1 : index
    %c2_88 = arith.constant 2 : index
    %189 = vector.load %arg6[%188, %c1_87, %c2_88] : memref<4x18x18xf32, #tpu.memory_space<vmem>>, vector<1x16x16xf32>
    %190 = vector.shape_cast %189 : vector<1x16x16xf32> to vector<16x16xf32>
    %191 = vector.broadcast %187 : f32 to vector<16x16xf32>
    %192 = arith.mulf %191, %190 : vector<16x16xf32>
    %193 = arith.addf %182, %192 : vector<16x16xf32>
    %c9_i32_89 = arith.constant 9 : i32
    %194 = arith.muli %126, %c9_i32_89 : i32
    %c6_i32_90 = arith.constant 6 : i32
    %195 = arith.addi %194, %c6_i32_90 : i32
    %c0_i32_91 = arith.constant 0 : i32
    %196 = arith.addi %195, %c0_i32_91 : i32
    %197 = arith.index_cast %196 : i32 to index
    %198 = memref.load %arg3[%197] : memref<36xf32, #tpu.memory_space<smem>>
    %199 = arith.index_cast %c1_i32_57 : i32 to index
    %c2_92 = arith.constant 2 : index
    %c0_93 = arith.constant 0 : index
    %200 = vector.load %arg6[%199, %c2_92, %c0_93] : memref<4x18x18xf32, #tpu.memory_space<vmem>>, vector<1x16x16xf32>
    %201 = vector.shape_cast %200 : vector<1x16x16xf32> to vector<16x16xf32>
    %202 = vector.broadcast %198 : f32 to vector<16x16xf32>
    %203 = arith.mulf %202, %201 : vector<16x16xf32>
    %204 = arith.addf %193, %203 : vector<16x16xf32>
    %c9_i32_94 = arith.constant 9 : i32
    %205 = arith.muli %126, %c9_i32_94 : i32
    %c6_i32_95 = arith.constant 6 : i32
    %206 = arith.addi %205, %c6_i32_95 : i32
    %c1_i32_96 = arith.constant 1 : i32
    %207 = arith.addi %206, %c1_i32_96 : i32
    %208 = arith.index_cast %207 : i32 to index
    %209 = memref.load %arg3[%208] : memref<36xf32, #tpu.memory_space<smem>>
    %210 = arith.index_cast %c1_i32_57 : i32 to index
    %c2_97 = arith.constant 2 : index
    %c1_98 = arith.constant 1 : index
    %211 = vector.load %arg6[%210, %c2_97, %c1_98] : memref<4x18x18xf32, #tpu.memory_space<vmem>>, vector<1x16x16xf32>
    %212 = vector.shape_cast %211 : vector<1x16x16xf32> to vector<16x16xf32>
    %213 = vector.broadcast %209 : f32 to vector<16x16xf32>
    %214 = arith.mulf %213, %212 : vector<16x16xf32>
    %215 = arith.addf %204, %214 : vector<16x16xf32>
    %c9_i32_99 = arith.constant 9 : i32
    %216 = arith.muli %126, %c9_i32_99 : i32
    %c6_i32_100 = arith.constant 6 : i32
    %217 = arith.addi %216, %c6_i32_100 : i32
    %c2_i32_101 = arith.constant 2 : i32
    %218 = arith.addi %217, %c2_i32_101 : i32
    %219 = arith.index_cast %218 : i32 to index
    %220 = memref.load %arg3[%219] : memref<36xf32, #tpu.memory_space<smem>>
    %221 = arith.index_cast %c1_i32_57 : i32 to index
    %c2_102 = arith.constant 2 : index
    %c2_103 = arith.constant 2 : index
    %222 = vector.load %arg6[%221, %c2_102, %c2_103] : memref<4x18x18xf32, #tpu.memory_space<vmem>>, vector<1x16x16xf32>
    %223 = vector.shape_cast %222 : vector<1x16x16xf32> to vector<16x16xf32>
    %224 = vector.broadcast %220 : f32 to vector<16x16xf32>
    %225 = arith.mulf %224, %223 : vector<16x16xf32>
    %226 = arith.addf %215, %225 : vector<16x16xf32>
    %227 = arith.index_cast %126 : i32 to index
    %228 = memref.load %arg4[%227] : memref<4xf32, #tpu.memory_space<smem>>
    %229 = vector.broadcast %228 : f32 to vector<16x16xf32>
    %230 = arith.addf %226, %229 : vector<16x16xf32>
    %cst_104 = arith.constant 0.000000e+00 : f32
    %231 = vector.broadcast %cst_104 : f32 to vector<16x16xf32>
    %232 = arith.subf %231, %230 : vector<16x16xf32>
    %233 = math.exp %232 : vector<16x16xf32>
    %cst_105 = arith.constant 1.000000e+00 : f32
    %234 = vector.broadcast %cst_105 : f32 to vector<16x16xf32>
    %235 = arith.addf %234, %233 : vector<16x16xf32>
    %cst_106 = arith.constant 1.000000e+00 : f32
    %236 = vector.broadcast %cst_106 : f32 to vector<16x16xf32>
    %237 = arith.divf %236, %235 : vector<16x16xf32>
    %c0_107 = arith.constant 0 : index
    %238 = arith.index_cast %c1_i32_57 : i32 to index
    %c0_108 = arith.constant 0 : index
    %c0_109 = arith.constant 0 : index
    %239 = vector.load %arg2[%c0_107, %238, %c0_108, %c0_109] : memref<1x4x16x16xf32, #tpu.memory_space<vmem>>, vector<1x1x16x16xf32>
    %240 = vector.shape_cast %239 : vector<1x1x16x16xf32> to vector<16x16xf32>
    %241 = arith.mulf %240, %237 : vector<16x16xf32>
    %c0_110 = arith.constant 0 : index
    %242 = arith.index_cast %c1_i32_57 : i32 to index
    %c0_111 = arith.constant 0 : index
    %c0_112 = arith.constant 0 : index
    %243 = vector.load %arg5[%c0_110, %242, %c0_111, %c0_112] : memref<1x4x16x16xf32, #tpu.memory_space<vmem>>, vector<1x1x16x16xf32>
    %244 = vector.shape_cast %243 : vector<1x1x16x16xf32> to vector<16x16xf32>
    %245 = vector.shape_cast %241 : vector<16x16xf32> to vector<1x1x16x16xf32>
    tpu.vector_store %arg5[%c0_110, %242, %c0_111, %c0_112], %245 {strides = array<i32>} : memref<1x4x16x16xf32, #tpu.memory_space<vmem>>, vector<1x1x16x16xf32>,
    %c2_i32_113 = arith.constant 2 : i32
    %246 = arith.addi %0, %c2_i32_113 : i32
    %cst_114 = arith.constant 0.000000e+00 : f32
    %247 = vector.broadcast %cst_114 : f32 to vector<16x16xf32>
    %c9_i32_115 = arith.constant 9 : i32
    %248 = arith.muli %246, %c9_i32_115 : i32
    %c0_i32_116 = arith.constant 0 : i32
    %249 = arith.addi %248, %c0_i32_116 : i32
    %c0_i32_117 = arith.constant 0 : i32
    %250 = arith.addi %249, %c0_i32_117 : i32
    %251 = arith.index_cast %250 : i32 to index
    %252 = memref.load %arg3[%251] : memref<36xf32, #tpu.memory_space<smem>>
    %253 = arith.index_cast %c2_i32_113 : i32 to index
    %c0_118 = arith.constant 0 : index
    %c0_119 = arith.constant 0 : index
    %254 = vector.load %arg6[%253, %c0_118, %c0_119] : memref<4x18x18xf32, #tpu.memory_space<vmem>>, vector<1x16x16xf32>
    %255 = vector.shape_cast %254 : vector<1x16x16xf32> to vector<16x16xf32>
    %256 = vector.broadcast %252 : f32 to vector<16x16xf32>
    %257 = arith.mulf %256, %255 : vector<16x16xf32>
    %258 = arith.addf %247, %257 : vector<16x16xf32>
    %c9_i32_120 = arith.constant 9 : i32
    %259 = arith.muli %246, %c9_i32_120 : i32
    %c0_i32_121 = arith.constant 0 : i32
    %260 = arith.addi %259, %c0_i32_121 : i32
    %c1_i32_122 = arith.constant 1 : i32
    %261 = arith.addi %260, %c1_i32_122 : i32
    %262 = arith.index_cast %261 : i32 to index
    %263 = memref.load %arg3[%262] : memref<36xf32, #tpu.memory_space<smem>>
    %264 = arith.index_cast %c2_i32_113 : i32 to index
    %c0_123 = arith.constant 0 : index
    %c1_124 = arith.constant 1 : index
    %265 = vector.load %arg6[%264, %c0_123, %c1_124] : memref<4x18x18xf32, #tpu.memory_space<vmem>>, vector<1x16x16xf32>
    %266 = vector.shape_cast %265 : vector<1x16x16xf32> to vector<16x16xf32>
    %267 = vector.broadcast %263 : f32 to vector<16x16xf32>
    %268 = arith.mulf %267, %266 : vector<16x16xf32>
    %269 = arith.addf %258, %268 : vector<16x16xf32>
    %c9_i32_125 = arith.constant 9 : i32
    %270 = arith.muli %246, %c9_i32_125 : i32
    %c0_i32_126 = arith.constant 0 : i32
    %271 = arith.addi %270, %c0_i32_126 : i32
    %c2_i32_127 = arith.constant 2 : i32
    %272 = arith.addi %271, %c2_i32_127 : i32
    %273 = arith.index_cast %272 : i32 to index
    %274 = memref.load %arg3[%273] : memref<36xf32, #tpu.memory_space<smem>>
    %275 = arith.index_cast %c2_i32_113 : i32 to index
    %c0_128 = arith.constant 0 : index
    %c2_129 = arith.constant 2 : index
    %276 = vector.load %arg6[%275, %c0_128, %c2_129] : memref<4x18x18xf32, #tpu.memory_space<vmem>>, vector<1x16x16xf32>
    %277 = vector.shape_cast %276 : vector<1x16x16xf32> to vector<16x16xf32>
    %278 = vector.broadcast %274 : f32 to vector<16x16xf32>
    %279 = arith.mulf %278, %277 : vector<16x16xf32>
    %280 = arith.addf %269, %279 : vector<16x16xf32>
    %c9_i32_130 = arith.constant 9 : i32
    %281 = arith.muli %246, %c9_i32_130 : i32
    %c3_i32_131 = arith.constant 3 : i32
    %282 = arith.addi %281, %c3_i32_131 : i32
    %c0_i32_132 = arith.constant 0 : i32
    %283 = arith.addi %282, %c0_i32_132 : i32
    %284 = arith.index_cast %283 : i32 to index
    %285 = memref.load %arg3[%284] : memref<36xf32, #tpu.memory_space<smem>>
    %286 = arith.index_cast %c2_i32_113 : i32 to index
    %c1_133 = arith.constant 1 : index
    %c0_134 = arith.constant 0 : index
    %287 = vector.load %arg6[%286, %c1_133, %c0_134] : memref<4x18x18xf32, #tpu.memory_space<vmem>>, vector<1x16x16xf32>
    %288 = vector.shape_cast %287 : vector<1x16x16xf32> to vector<16x16xf32>
    %289 = vector.broadcast %285 : f32 to vector<16x16xf32>
    %290 = arith.mulf %289, %288 : vector<16x16xf32>
    %291 = arith.addf %280, %290 : vector<16x16xf32>
    %c9_i32_135 = arith.constant 9 : i32
    %292 = arith.muli %246, %c9_i32_135 : i32
    %c3_i32_136 = arith.constant 3 : i32
    %293 = arith.addi %292, %c3_i32_136 : i32
    %c1_i32_137 = arith.constant 1 : i32
    %294 = arith.addi %293, %c1_i32_137 : i32
    %295 = arith.index_cast %294 : i32 to index
    %296 = memref.load %arg3[%295] : memref<36xf32, #tpu.memory_space<smem>>
    %297 = arith.index_cast %c2_i32_113 : i32 to index
    %c1_138 = arith.constant 1 : index
    %c1_139 = arith.constant 1 : index
    %298 = vector.load %arg6[%297, %c1_138, %c1_139] : memref<4x18x18xf32, #tpu.memory_space<vmem>>, vector<1x16x16xf32>
    %299 = vector.shape_cast %298 : vector<1x16x16xf32> to vector<16x16xf32>
    %300 = vector.broadcast %296 : f32 to vector<16x16xf32>
    %301 = arith.mulf %300, %299 : vector<16x16xf32>
    %302 = arith.addf %291, %301 : vector<16x16xf32>
    %c9_i32_140 = arith.constant 9 : i32
    %303 = arith.muli %246, %c9_i32_140 : i32
    %c3_i32_141 = arith.constant 3 : i32
    %304 = arith.addi %303, %c3_i32_141 : i32
    %c2_i32_142 = arith.constant 2 : i32
    %305 = arith.addi %304, %c2_i32_142 : i32
    %306 = arith.index_cast %305 : i32 to index
    %307 = memref.load %arg3[%306] : memref<36xf32, #tpu.memory_space<smem>>
    %308 = arith.index_cast %c2_i32_113 : i32 to index
    %c1_143 = arith.constant 1 : index
    %c2_144 = arith.constant 2 : index
    %309 = vector.load %arg6[%308, %c1_143, %c2_144] : memref<4x18x18xf32, #tpu.memory_space<vmem>>, vector<1x16x16xf32>
    %310 = vector.shape_cast %309 : vector<1x16x16xf32> to vector<16x16xf32>
    %311 = vector.broadcast %307 : f32 to vector<16x16xf32>
    %312 = arith.mulf %311, %310 : vector<16x16xf32>
    %313 = arith.addf %302, %312 : vector<16x16xf32>
    %c9_i32_145 = arith.constant 9 : i32
    %314 = arith.muli %246, %c9_i32_145 : i32
    %c6_i32_146 = arith.constant 6 : i32
    %315 = arith.addi %314, %c6_i32_146 : i32
    %c0_i32_147 = arith.constant 0 : i32
    %316 = arith.addi %315, %c0_i32_147 : i32
    %317 = arith.index_cast %316 : i32 to index
    %318 = memref.load %arg3[%317] : memref<36xf32, #tpu.memory_space<smem>>
    %319 = arith.index_cast %c2_i32_113 : i32 to index
    %c2_148 = arith.constant 2 : index
    %c0_149 = arith.constant 0 : index
    %320 = vector.load %arg6[%319, %c2_148, %c0_149] : memref<4x18x18xf32, #tpu.memory_space<vmem>>, vector<1x16x16xf32>
    %321 = vector.shape_cast %320 : vector<1x16x16xf32> to vector<16x16xf32>
    %322 = vector.broadcast %318 : f32 to vector<16x16xf32>
    %323 = arith.mulf %322, %321 : vector<16x16xf32>
    %324 = arith.addf %313, %323 : vector<16x16xf32>
    %c9_i32_150 = arith.constant 9 : i32
    %325 = arith.muli %246, %c9_i32_150 : i32
    %c6_i32_151 = arith.constant 6 : i32
    %326 = arith.addi %325, %c6_i32_151 : i32
    %c1_i32_152 = arith.constant 1 : i32
    %327 = arith.addi %326, %c1_i32_152 : i32
    %328 = arith.index_cast %327 : i32 to index
    %329 = memref.load %arg3[%328] : memref<36xf32, #tpu.memory_space<smem>>
    %330 = arith.index_cast %c2_i32_113 : i32 to index
    %c2_153 = arith.constant 2 : index
    %c1_154 = arith.constant 1 : index
    %331 = vector.load %arg6[%330, %c2_153, %c1_154] : memref<4x18x18xf32, #tpu.memory_space<vmem>>, vector<1x16x16xf32>
    %332 = vector.shape_cast %331 : vector<1x16x16xf32> to vector<16x16xf32>
    %333 = vector.broadcast %329 : f32 to vector<16x16xf32>
    %334 = arith.mulf %333, %332 : vector<16x16xf32>
    %335 = arith.addf %324, %334 : vector<16x16xf32>
    %c9_i32_155 = arith.constant 9 : i32
    %336 = arith.muli %246, %c9_i32_155 : i32
    %c6_i32_156 = arith.constant 6 : i32
    %337 = arith.addi %336, %c6_i32_156 : i32
    %c2_i32_157 = arith.constant 2 : i32
    %338 = arith.addi %337, %c2_i32_157 : i32
    %339 = arith.index_cast %338 : i32 to index
    %340 = memref.load %arg3[%339] : memref<36xf32, #tpu.memory_space<smem>>
    %341 = arith.index_cast %c2_i32_113 : i32 to index
    %c2_158 = arith.constant 2 : index
    %c2_159 = arith.constant 2 : index
    %342 = vector.load %arg6[%341, %c2_158, %c2_159] : memref<4x18x18xf32, #tpu.memory_space<vmem>>, vector<1x16x16xf32>
    %343 = vector.shape_cast %342 : vector<1x16x16xf32> to vector<16x16xf32>
    %344 = vector.broadcast %340 : f32 to vector<16x16xf32>
    %345 = arith.mulf %344, %343 : vector<16x16xf32>
    %346 = arith.addf %335, %345 : vector<16x16xf32>
    %347 = arith.index_cast %246 : i32 to index
    %348 = memref.load %arg4[%347] : memref<4xf32, #tpu.memory_space<smem>>
    %349 = vector.broadcast %348 : f32 to vector<16x16xf32>
    %350 = arith.addf %346, %349 : vector<16x16xf32>
    %cst_160 = arith.constant 0.000000e+00 : f32
    %351 = vector.broadcast %cst_160 : f32 to vector<16x16xf32>
    %352 = arith.subf %351, %350 : vector<16x16xf32>
    %353 = math.exp %352 : vector<16x16xf32>
    %cst_161 = arith.constant 1.000000e+00 : f32
    %354 = vector.broadcast %cst_161 : f32 to vector<16x16xf32>
    %355 = arith.addf %354, %353 : vector<16x16xf32>
    %cst_162 = arith.constant 1.000000e+00 : f32
    %356 = vector.broadcast %cst_162 : f32 to vector<16x16xf32>
    %357 = arith.divf %356, %355 : vector<16x16xf32>
    %c0_163 = arith.constant 0 : index
    %358 = arith.index_cast %c2_i32_113 : i32 to index
    %c0_164 = arith.constant 0 : index
    %c0_165 = arith.constant 0 : index
    %359 = vector.load %arg2[%c0_163, %358, %c0_164, %c0_165] : memref<1x4x16x16xf32, #tpu.memory_space<vmem>>, vector<1x1x16x16xf32>
    %360 = vector.shape_cast %359 : vector<1x1x16x16xf32> to vector<16x16xf32>
    %361 = arith.mulf %360, %357 : vector<16x16xf32>
    %c0_166 = arith.constant 0 : index
    %362 = arith.index_cast %c2_i32_113 : i32 to index
    %c0_167 = arith.constant 0 : index
    %c0_168 = arith.constant 0 : index
    %363 = vector.load %arg5[%c0_166, %362, %c0_167, %c0_168] : memref<1x4x16x16xf32, #tpu.memory_space<vmem>>, vector<1x1x16x16xf32>
    %364 = vector.shape_cast %363 : vector<1x1x16x16xf32> to vector<16x16xf32>
    %365 = vector.shape_cast %361 : vector<16x16xf32> to vector<1x1x16x16xf32>
    tpu.vector_store %arg5[%c0_166, %362, %c0_167, %c0_168], %365 {strides = array<i32>} : memref<1x4x16x16xf32, #tpu.memory_space<vmem>>, vector<1x1x16x16xf32>,
    %c3_i32_169 = arith.constant 3 : i32
    %366 = arith.addi %0, %c3_i32_169 : i32
    %cst_170 = arith.constant 0.000000e+00 : f32
    %367 = vector.broadcast %cst_170 : f32 to vector<16x16xf32>
    %c9_i32_171 = arith.constant 9 : i32
    %368 = arith.muli %366, %c9_i32_171 : i32
    %c0_i32_172 = arith.constant 0 : i32
    %369 = arith.addi %368, %c0_i32_172 : i32
    %c0_i32_173 = arith.constant 0 : i32
    %370 = arith.addi %369, %c0_i32_173 : i32
    %371 = arith.index_cast %370 : i32 to index
    %372 = memref.load %arg3[%371] : memref<36xf32, #tpu.memory_space<smem>>
    %373 = arith.index_cast %c3_i32_169 : i32 to index
    %c0_174 = arith.constant 0 : index
    %c0_175 = arith.constant 0 : index
    %374 = vector.load %arg6[%373, %c0_174, %c0_175] : memref<4x18x18xf32, #tpu.memory_space<vmem>>, vector<1x16x16xf32>
    %375 = vector.shape_cast %374 : vector<1x16x16xf32> to vector<16x16xf32>
    %376 = vector.broadcast %372 : f32 to vector<16x16xf32>
    %377 = arith.mulf %376, %375 : vector<16x16xf32>
    %378 = arith.addf %367, %377 : vector<16x16xf32>
    %c9_i32_176 = arith.constant 9 : i32
    %379 = arith.muli %366, %c9_i32_176 : i32
    %c0_i32_177 = arith.constant 0 : i32
    %380 = arith.addi %379, %c0_i32_177 : i32
    %c1_i32_178 = arith.constant 1 : i32
    %381 = arith.addi %380, %c1_i32_178 : i32
    %382 = arith.index_cast %381 : i32 to index
    %383 = memref.load %arg3[%382] : memref<36xf32, #tpu.memory_space<smem>>
    %384 = arith.index_cast %c3_i32_169 : i32 to index
    %c0_179 = arith.constant 0 : index
    %c1_180 = arith.constant 1 : index
    %385 = vector.load %arg6[%384, %c0_179, %c1_180] : memref<4x18x18xf32, #tpu.memory_space<vmem>>, vector<1x16x16xf32>
    %386 = vector.shape_cast %385 : vector<1x16x16xf32> to vector<16x16xf32>
    %387 = vector.broadcast %383 : f32 to vector<16x16xf32>
    %388 = arith.mulf %387, %386 : vector<16x16xf32>
    %389 = arith.addf %378, %388 : vector<16x16xf32>
    %c9_i32_181 = arith.constant 9 : i32
    %390 = arith.muli %366, %c9_i32_181 : i32
    %c0_i32_182 = arith.constant 0 : i32
    %391 = arith.addi %390, %c0_i32_182 : i32
    %c2_i32_183 = arith.constant 2 : i32
    %392 = arith.addi %391, %c2_i32_183 : i32
    %393 = arith.index_cast %392 : i32 to index
    %394 = memref.load %arg3[%393] : memref<36xf32, #tpu.memory_space<smem>>
    %395 = arith.index_cast %c3_i32_169 : i32 to index
    %c0_184 = arith.constant 0 : index
    %c2_185 = arith.constant 2 : index
    %396 = vector.load %arg6[%395, %c0_184, %c2_185] : memref<4x18x18xf32, #tpu.memory_space<vmem>>, vector<1x16x16xf32>
    %397 = vector.shape_cast %396 : vector<1x16x16xf32> to vector<16x16xf32>
    %398 = vector.broadcast %394 : f32 to vector<16x16xf32>
    %399 = arith.mulf %398, %397 : vector<16x16xf32>
    %400 = arith.addf %389, %399 : vector<16x16xf32>
    %c9_i32_186 = arith.constant 9 : i32
    %401 = arith.muli %366, %c9_i32_186 : i32
    %c3_i32_187 = arith.constant 3 : i32
    %402 = arith.addi %401, %c3_i32_187 : i32
    %c0_i32_188 = arith.constant 0 : i32
    %403 = arith.addi %402, %c0_i32_188 : i32
    %404 = arith.index_cast %403 : i32 to index
    %405 = memref.load %arg3[%404] : memref<36xf32, #tpu.memory_space<smem>>
    %406 = arith.index_cast %c3_i32_169 : i32 to index
    %c1_189 = arith.constant 1 : index
    %c0_190 = arith.constant 0 : index
    %407 = vector.load %arg6[%406, %c1_189, %c0_190] : memref<4x18x18xf32, #tpu.memory_space<vmem>>, vector<1x16x16xf32>
    %408 = vector.shape_cast %407 : vector<1x16x16xf32> to vector<16x16xf32>
    %409 = vector.broadcast %405 : f32 to vector<16x16xf32>
    %410 = arith.mulf %409, %408 : vector<16x16xf32>
    %411 = arith.addf %400, %410 : vector<16x16xf32>
    %c9_i32_191 = arith.constant 9 : i32
    %412 = arith.muli %366, %c9_i32_191 : i32
    %c3_i32_192 = arith.constant 3 : i32
    %413 = arith.addi %412, %c3_i32_192 : i32
    %c1_i32_193 = arith.constant 1 : i32
    %414 = arith.addi %413, %c1_i32_193 : i32
    %415 = arith.index_cast %414 : i32 to index
    %416 = memref.load %arg3[%415] : memref<36xf32, #tpu.memory_space<smem>>
    %417 = arith.index_cast %c3_i32_169 : i32 to index
    %c1_194 = arith.constant 1 : index
    %c1_195 = arith.constant 1 : index
    %418 = vector.load %arg6[%417, %c1_194, %c1_195] : memref<4x18x18xf32, #tpu.memory_space<vmem>>, vector<1x16x16xf32>
    %419 = vector.shape_cast %418 : vector<1x16x16xf32> to vector<16x16xf32>
    %420 = vector.broadcast %416 : f32 to vector<16x16xf32>
    %421 = arith.mulf %420, %419 : vector<16x16xf32>
    %422 = arith.addf %411, %421 : vector<16x16xf32>
    %c9_i32_196 = arith.constant 9 : i32
    %423 = arith.muli %366, %c9_i32_196 : i32
    %c3_i32_197 = arith.constant 3 : i32
    %424 = arith.addi %423, %c3_i32_197 : i32
    %c2_i32_198 = arith.constant 2 : i32
    %425 = arith.addi %424, %c2_i32_198 : i32
    %426 = arith.index_cast %425 : i32 to index
    %427 = memref.load %arg3[%426] : memref<36xf32, #tpu.memory_space<smem>>
    %428 = arith.index_cast %c3_i32_169 : i32 to index
    %c1_199 = arith.constant 1 : index
    %c2_200 = arith.constant 2 : index
    %429 = vector.load %arg6[%428, %c1_199, %c2_200] : memref<4x18x18xf32, #tpu.memory_space<vmem>>, vector<1x16x16xf32>
    %430 = vector.shape_cast %429 : vector<1x16x16xf32> to vector<16x16xf32>
    %431 = vector.broadcast %427 : f32 to vector<16x16xf32>
    %432 = arith.mulf %431, %430 : vector<16x16xf32>
    %433 = arith.addf %422, %432 : vector<16x16xf32>
    %c9_i32_201 = arith.constant 9 : i32
    %434 = arith.muli %366, %c9_i32_201 : i32
    %c6_i32_202 = arith.constant 6 : i32
    %435 = arith.addi %434, %c6_i32_202 : i32
    %c0_i32_203 = arith.constant 0 : i32
    %436 = arith.addi %435, %c0_i32_203 : i32
    %437 = arith.index_cast %436 : i32 to index
    %438 = memref.load %arg3[%437] : memref<36xf32, #tpu.memory_space<smem>>
    %439 = arith.index_cast %c3_i32_169 : i32 to index
    %c2_204 = arith.constant 2 : index
    %c0_205 = arith.constant 0 : index
    %440 = vector.load %arg6[%439, %c2_204, %c0_205] : memref<4x18x18xf32, #tpu.memory_space<vmem>>, vector<1x16x16xf32>
    %441 = vector.shape_cast %440 : vector<1x16x16xf32> to vector<16x16xf32>
    %442 = vector.broadcast %438 : f32 to vector<16x16xf32>
    %443 = arith.mulf %442, %441 : vector<16x16xf32>
    %444 = arith.addf %433, %443 : vector<16x16xf32>
    %c9_i32_206 = arith.constant 9 : i32
    %445 = arith.muli %366, %c9_i32_206 : i32
    %c6_i32_207 = arith.constant 6 : i32
    %446 = arith.addi %445, %c6_i32_207 : i32
    %c1_i32_208 = arith.constant 1 : i32
    %447 = arith.addi %446, %c1_i32_208 : i32
    %448 = arith.index_cast %447 : i32 to index
    %449 = memref.load %arg3[%448] : memref<36xf32, #tpu.memory_space<smem>>
    %450 = arith.index_cast %c3_i32_169 : i32 to index
    %c2_209 = arith.constant 2 : index
    %c1_210 = arith.constant 1 : index
    %451 = vector.load %arg6[%450, %c2_209, %c1_210] : memref<4x18x18xf32, #tpu.memory_space<vmem>>, vector<1x16x16xf32>
    %452 = vector.shape_cast %451 : vector<1x16x16xf32> to vector<16x16xf32>
    %453 = vector.broadcast %449 : f32 to vector<16x16xf32>
    %454 = arith.mulf %453, %452 : vector<16x16xf32>
    %455 = arith.addf %444, %454 : vector<16x16xf32>
    %c9_i32_211 = arith.constant 9 : i32
    %456 = arith.muli %366, %c9_i32_211 : i32
    %c6_i32_212 = arith.constant 6 : i32
    %457 = arith.addi %456, %c6_i32_212 : i32
    %c2_i32_213 = arith.constant 2 : i32
    %458 = arith.addi %457, %c2_i32_213 : i32
    %459 = arith.index_cast %458 : i32 to index
    %460 = memref.load %arg3[%459] : memref<36xf32, #tpu.memory_space<smem>>
    %461 = arith.index_cast %c3_i32_169 : i32 to index
    %c2_214 = arith.constant 2 : index
    %c2_215 = arith.constant 2 : index
    %462 = vector.load %arg6[%461, %c2_214, %c2_215] : memref<4x18x18xf32, #tpu.memory_space<vmem>>, vector<1x16x16xf32>
    %463 = vector.shape_cast %462 : vector<1x16x16xf32> to vector<16x16xf32>
    %464 = vector.broadcast %460 : f32 to vector<16x16xf32>
    %465 = arith.mulf %464, %463 : vector<16x16xf32>
    %466 = arith.addf %455, %465 : vector<16x16xf32>
    %467 = arith.index_cast %366 : i32 to index
    %468 = memref.load %arg4[%467] : memref<4xf32, #tpu.memory_space<smem>>
    %469 = vector.broadcast %468 : f32 to vector<16x16xf32>
    %470 = arith.addf %466, %469 : vector<16x16xf32>
    %cst_216 = arith.constant 0.000000e+00 : f32
    %471 = vector.broadcast %cst_216 : f32 to vector<16x16xf32>
    %472 = arith.subf %471, %470 : vector<16x16xf32>
    %473 = math.exp %472 : vector<16x16xf32>
    %cst_217 = arith.constant 1.000000e+00 : f32
    %474 = vector.broadcast %cst_217 : f32 to vector<16x16xf32>
    %475 = arith.addf %474, %473 : vector<16x16xf32>
    %cst_218 = arith.constant 1.000000e+00 : f32
    %476 = vector.broadcast %cst_218 : f32 to vector<16x16xf32>
    %477 = arith.divf %476, %475 : vector<16x16xf32>
    %c0_219 = arith.constant 0 : index
    %478 = arith.index_cast %c3_i32_169 : i32 to index
    %c0_220 = arith.constant 0 : index
    %c0_221 = arith.constant 0 : index
    %479 = vector.load %arg2[%c0_219, %478, %c0_220, %c0_221] : memref<1x4x16x16xf32, #tpu.memory_space<vmem>>, vector<1x1x16x16xf32>
    %480 = vector.shape_cast %479 : vector<1x1x16x16xf32> to vector<16x16xf32>
    %481 = arith.mulf %480, %477 : vector<16x16xf32>
    %c0_222 = arith.constant 0 : index
    %482 = arith.index_cast %c3_i32_169 : i32 to index
    %c0_223 = arith.constant 0 : index
    %c0_224 = arith.constant 0 : index
    %483 = vector.load %arg5[%c0_222, %482, %c0_223, %c0_224] : memref<1x4x16x16xf32, #tpu.memory_space<vmem>>, vector<1x1x16x16xf32>
    %484 = vector.shape_cast %483 : vector<1x1x16x16xf32> to vector<16x16xf32>
    %485 = vector.shape_cast %481 : vector<16x16xf32> to vector<1x1x16x16xf32>
    tpu.vector_store %arg5[%c0_222, %482, %c0_223, %c0_224], %485 {strides = array<i32>} : memref<1x4x16x16xf32, #tpu.memory_space<vmem>>, vector<1x1x16x16xf32>,
    %c4_i32_225 = arith.constant 4 : i32
    return
  }
  func.func @transform_0(%arg0: i32, %arg1: i32) -> (i32, i32, i32, i32) {
    %c0_i32 = arith.constant 0 : i32
    %c0_i32_0 = arith.constant 0 : i32
    %c0_i32_1 = arith.constant 0 : i32
    return %arg0, %arg1, %c0_i32, %c0_i32_0 : i32, i32, i32, i32
  }
  func.func @transform_1(%arg0: i32, %arg1: i32) -> i32 {
    %c0_i32 = arith.constant 0 : i32
    %c0_i32_0 = arith.constant 0 : i32
    return %c0_i32 : i32
  }
  func.func @transform_2(%arg0: i32, %arg1: i32) -> i32 {
    %c0_i32 = arith.constant 0 : i32
    %c0_i32_0 = arith.constant 0 : i32
    return %c0_i32 : i32
  }
  func.func @transform_3(%arg0: i32, %arg1: i32) -> (i32, i32, i32, i32) {
    %c0_i32 = arith.constant 0 : i32
    %c0_i32_0 = arith.constant 0 : i32
    %c0_i32_1 = arith.constant 0 : i32
    return %arg0, %arg1, %c0_i32, %c0_i32_0 : i32, i32, i32, i32
  }
}

</mosaic_0001>

<llo_original>
// kernel: tpu_custom_call.1
$region0: #{tpu_custom_call.1}
  #allocation0 [shape = 'u32[]', space=smem, size = 0x4, offset = 0x4, fixed_abs, tag = 'smem constant byte address 0x4 - core index']
  #allocation1 [shape = 'u32[144,128]{1,0:T(1,128)}', space=vmem, size = 0x12000, scoped, tag = 'internal scratch']
  #allocation2 [shape = 'f32[4,18,18]{2,1,0:T(8,128)}', space=vmem, size = 0xc000, scoped, tag = 'scratch operand']
  %s0 = inlined_call_operand.hbm [shape: f32[2,4,16,16], index: 0, kind: input, shape index: {}]
  %s1 = inlined_call_operand.vmem [shape: f32[36], index: 1, kind: input, shape index: {}]
  %s2 = inlined_call_operand.vmem [shape: f32[4], index: 2, kind: input, shape index: {}]
  %s3 = inlined_call_operand.hbm [shape: f32[2,4,16,16], index: 3, kind: output, shape index: {}]
  %s4 = sld [smem:[#allocation0]]
  $region57: #{tpu_custom_call.1} parent=0
    _
  %s6 = ssub.s32 1, %s4
  %s7 = scalar_select 0, %s6, %s4
  $region1: #{tpu_custom_call.1} parent=0
    #allocation3 [shape = 'u8[65536]{0}', space=vmem, size = 0x10000, scoped, tag = 'input window, operand 0']
    #allocation4 [shape = 's32[2]{0}', space=sflag, size = 0x8, scoped, tag = 'scoped memory for tpu_custom_call.1']
    #allocation5 [shape = 's32[2]{0}', space=sflag, size = 0x8, scoped, tag = 'scoped memory for tpu_custom_call.1']
    #allocation6 [shape = 's32[2]{0}', space=sflag, size = 0x8, scoped, tag = 'scoped memory for tpu_custom_call.1']
    #allocation7 [shape = 'u8[512]{0}', space=smem, size = 0x200, scoped, tag = 'input window, operand 1, single buffered']
    #allocation8 [shape = 'u8[512]{0}', space=smem, size = 0x200, scoped, tag = 'input window, operand 2, single buffered']
    #allocation9 [shape = 's32[1]{0}', space=sflag, size = 0x4, scoped, tag = 'scoped memory for tpu_custom_call.1']
    #allocation10 [shape = 'u8[65536]{0}', space=vmem, size = 0x10000, scoped, tag = 'output window, operand 0']
    %8 = vsyncpa [#allocation4], 0
    %s9 = scalar_lea.sflag [#allocation4], 1
    %10 = vsyncpa %s9, 0
    %11 = vsyncpa [#allocation6], 0
    %12 = vsyncpa [#allocation9], 0
    %13 = vsyncpa [#allocation5], 0
    %s14 = scalar_lea.sflag [#allocation5], 1
    %15 = vsyncpa %s14, 0
    loop: start=0, step=1, limit=4
    $region2: #{tpu_custom_call.1} parent=1 // loop_pre_header
      _
    $region3: #{tpu_custom_call.1} parent=1 // loop_header
      %s17 = sphi 0, %s21
      %p18 = scmp.ge.s32.totalorder %s17, 4
      %s24 = sphi 0, %s36
      %s25 = sphi 0, %s32
      %s26 = sphi 0, %s24
      %s27 = sphi 0, %s25
      %s28 = sphi 0, %s26
      %s29 = sphi 0, %s27
      %s41 = sphi 0, %s43
      %s44 = sphi 0, %s41
      %s45 = sphi 0, %s44
      %s61 = sphi 0, %s45
      %s65 = sphi 0, %s65
      %s67 = sphi 0, %s65
      %s68 = sphi 0, %s67
      %s82 = sphi 0, %s68
      %s86 = sphi 0, %s86
      %s88 = sphi 0, %s86
      %s89 = sphi 0, %s88
      %s103 = sphi 0, %s89
      %s111 = sphi 0, %s113
      %s114 = sphi 0, %s111
      %s115 = sphi 0, %s114
      %s131 = sphi 0, %s115
    $region4: #{tpu_custom_call.1} parent=1 // loop_header_branch
      %20 = sbr.rel (%p18) target = $region8
    $region5: #{tpu_custom_call.1} parent=1 // loop_body
      %s22 = ssub.s32 %s17, 1
      %s23 = ssub.s32 %s17, 2
      %s30 = sadd.s32 1, %s25
      %p31 = scmp.ge.s32.totalorder %s30, 1
      %s32 = scalar_select %p31, 0, %s30
      %s33 = sadd.s32 1, %s24
      %s34 = scalar_select %p31, %s33, %s24
      %p35 = scmp.ge.s32.totalorder %s34, 2
      %s36 = scalar_select %p35, 0, %s34
      %s37 = ssub.s32 %s24, %s36
      %s38 = ssub.s32 %s25, %s32
      %s39 = sor.u32 %s37, %s38
      %p40 = scmp.eq.s32.totalorder %s39, 0
      %s42 = sadd.s32 %s41, 1
      %s43 = scalar_select %p40, %s41, %s42
      %p46 = pneg %p40
      %p47 = scmp.eq.s32.totalorder %s17, 1
      %p48 = por %p46, %p47
      %p49 = scmp.ne.s32.totalorder %s41, %s44
      %p50 = scmp.eq.s32.totalorder %s17, 0
      %p51 = por %p49, %p50
      %p52 = scmp.ne.s32.totalorder %s41, %s44
      %p53 = scmp.eq.s32.totalorder %s22, 1
      %p54 = por %p52, %p53
      %p55 = scmp.ne.s32.totalorder %s44, %s45
      %p56 = scmp.eq.s32.totalorder %s22, 0
      %p57 = por %p55, %p56
      %p58 = scmp.ne.s32.totalorder %s44, %s45
      %p59 = scmp.eq.s32.totalorder %s23, 1
      %p60 = por %p58, %p59
      %p62 = scmp.ne.s32.totalorder %s45, %s61
      %p63 = scmp.eq.s32.totalorder %s23, 0
      %p64 = por %p62, %p63
      %s66 = sadd.s32 %s65, 1
      %p69 = scmp.eq.s32.totalorder %s17, 1
      %p70 = scmp.ne.s32.totalorder %s65, %s67
      %p71 = scmp.eq.s32.totalorder %s17, 0
      %p72 = por %p70, %p71
      %p73 = scmp.ne.s32.totalorder %s65, %s67
      %p74 = scmp.eq.s32.totalorder %s22, 1
      %p75 = por %p73, %p74
      %p76 = scmp.ne.s32.totalorder %s67, %s68
      %p77 = scmp.eq.s32.totalorder %s22, 0
      %p78 = por %p76, %p77
      %p79 = scmp.ne.s32.totalorder %s67, %s68
      %p80 = scmp.eq.s32.totalorder %s23, 1
      %p81 = por %p79, %p80
      %p83 = scmp.ne.s32.totalorder %s68, %s82
      %p84 = scmp.eq.s32.totalorder %s23, 0
      %p85 = por %p83, %p84
      %s87 = sadd.s32 %s86, 1
      %p90 = scmp.eq.s32.totalorder %s17, 1
      %p91 = scmp.ne.s32.totalorder %s86, %s88
      %p92 = scmp.eq.s32.totalorder %s17, 0
      %p93 = por %p91, %p92
      %p94 = scmp.ne.s32.totalorder %s86, %s88
      %p95 = scmp.eq.s32.totalorder %s22, 1
      %p96 = por %p94, %p95
      %p97 = scmp.ne.s32.totalorder %s88, %s89
      %p98 = scmp.eq.s32.totalorder %s22, 0
      %p99 = por %p97, %p98
      %p100 = scmp.ne.s32.totalorder %s88, %s89
      %p101 = scmp.eq.s32.totalorder %s23, 1
      %p102 = por %p100, %p101
      %p104 = scmp.ne.s32.totalorder %s89, %s103
      %p105 = scmp.eq.s32.totalorder %s23, 0
      %p106 = por %p104, %p105
      %s107 = ssub.s32 %s24, %s36
      %s108 = ssub.s32 %s25, %s32
      %s109 = sor.u32 %s107, %s108
      %p110 = scmp.eq.s32.totalorder %s109, 0
      %s112 = sadd.s32 %s111, 1
      %s113 = scalar_select %p110, %s111, %s112
      %p116 = pneg %p110
      %p117 = scmp.eq.s32.totalorder %s17, 1
      %p118 = por %p116, %p117
      %p119 = scmp.ne.s32.totalorder %s111, %s114
      %p120 = scmp.eq.s32.totalorder %s17, 0
      %p121 = por %p119, %p120
      %p122 = scmp.ne.s32.totalorder %s111, %s114
      %p123 = scmp.eq.s32.totalorder %s22, 1
      %p124 = por %p122, %p123
      %p125 = scmp.ne.s32.totalorder %s114, %s115
      %p126 = scmp.eq.s32.totalorder %s22, 0
      %p127 = por %p125, %p126
      %p128 = scmp.ne.s32.totalorder %s114, %s115
      %p129 = scmp.eq.s32.totalorder %s23, 1
      %p130 = por %p128, %p129
      %p132 = scmp.ne.s32.totalorder %s115, %s131
      %p133 = scmp.eq.s32.totalorder %s23, 0
      %p134 = por %p132, %p133
      %p135 = scmp.le.s32.totalorder 1, %s17
      %p136 = scmp.lt.s32.totalorder %s17, 3
      %p137 = pnand %p135, %p136
      %p138 = pneg %p137
      // Predicated region
      $region9: #{tpu_custom_call.1} parent=5 // pred_check
        _
      $region10: #{tpu_custom_call.1} parent=5 // pred_check_branch
        %140 = sbr.rel (%p137) target = $region12
      $region11: #{tpu_custom_call.1} parent=5 // pred_region
        %s141 = ssub.s32 %s17, 1
        // Predicated region
        $region13: #{tpu_custom_call.1} parent=11 // pred_check
          %p142 = pneg %p78
        $region14: #{tpu_custom_call.1} parent=11 // pred_check_branch
          %144 = sbr.rel (%p142) target = $region16
        $region15: #{tpu_custom_call.1} parent=11 // pred_region
          %s146 = ssub.s32 16, 16
          %147 = vsyncadd [#allocation6], %s146
          %s149 = sshll.u32 %s1, 4
          %s150 = int_to_ptr.vmem [resolvable:$true] %s149
          %152 = dma.vmem_to_smem %s150, 16, [#allocation7], [#allocation6]
        $region16: #{tpu_custom_call.1} parent=11 // pred_fallthru
          _
        // Predicated region
        $region17: #{tpu_custom_call.1} parent=11 // pred_check
          %p153 = pneg %p99
        $region18: #{tpu_custom_call.1} parent=11 // pred_check_branch
          %155 = sbr.rel (%p153) target = $region20
        $region19: #{tpu_custom_call.1} parent=11 // pred_region
          %s157 = ssub.s32 16, 16
          %158 = vsyncadd [#allocation9], %s157
          %s160 = sshll.u32 %s2, 4
          %s161 = int_to_ptr.vmem [resolvable:$true] %s160
          %163 = dma.vmem_to_smem %s161, 16, [#allocation8], [#allocation9]
        $region20: #{tpu_custom_call.1} parent=11 // pred_fallthru
          _
      $region12: #{tpu_custom_call.1} parent=5 // pred_fallthru
        _
      %p164 = scmp.lt.s32.totalorder %s17, 2
      // Predicated region
      $region21: #{tpu_custom_call.1} parent=5 // pred_check
        %p165 = pneg %p164
      $region22: #{tpu_custom_call.1} parent=5 // pred_check_branch
        %167 = sbr.rel (%p165) target = $region24
      $region23: #{tpu_custom_call.1} parent=5 // pred_region
        // Predicated region
        $region25: #{tpu_custom_call.1} parent=23 // pred_check
          %p168 = pneg %p51
        $region26: #{tpu_custom_call.1} parent=23 // pred_check_branch
          %170 = sbr.rel (%p168) target = $region28
        $region27: #{tpu_custom_call.1} parent=23 // pred_region
          %s171 = sand.u32 %s41, 1
          %s172 = scalar_lea.sflag [#allocation4], %s171
          %s173 = sand.u32 %s41, 1
          %s174 = smul.addr %s173, 64
          %s175 = scalar_lea.vmem [#allocation3], %s174
          %s176 = smul.u32 4, %s25
          %s178 = ssub.s32 1024, 1024
          %179 = vsyncadd %s172, %s178
          %s180 = smul.addr %s176, 2
          %s181 = smul.addr %s24, 8
          %s182 = sadd.s32 %s180, %s181
          %s183 = smul.addr %s182, 128
          %s184 = scalar_lea.hbm %s0, %s183
          %s185 = sshll.u32 %s175, 4
          %s186 = int_to_ptr.vmem [resolvable:$true] %s185
          %191 = dma.hbm_to_vmem [thread:$0]  %s184, 1024, %s186, %s172, 128, 128, 8
        $region28: #{tpu_custom_call.1} parent=23 // pred_fallthru
          _
      $region24: #{tpu_custom_call.1} parent=5 // pred_fallthru
        _
      %p192 = scmp.le.s32.totalorder 1, %s17
      %p193 = scmp.lt.s32.totalorder %s17, 3
      %p194 = pnand %p192, %p193
      %p195 = pneg %p194
      // Predicated region
      $region29: #{tpu_custom_call.1} parent=5 // pred_check
        _
      $region30: #{tpu_custom_call.1} parent=5 // pred_check_branch
        %197 = sbr.rel (%p194) target = $region32
      $region31: #{tpu_custom_call.1} parent=5 // pred_region
        %s198 = ssub.s32 %s17, 1
        %s199 = sand.u32 %s44, 1
        %s200 = scalar_lea.sflag [#allocation4], %s199
        %s201 = sand.u32 %s44, 1
        %s202 = smul.addr %s201, 64
        %s203 = scalar_lea.vmem [#allocation3], %s202
        // Predicated region
        $region33: #{tpu_custom_call.1} parent=31 // pred_check
          %p204 = pneg %p57
        $region34: #{tpu_custom_call.1} parent=31 // pred_check_branch
          %206 = sbr.rel (%p204) target = $region36
        $region35: #{tpu_custom_call.1} parent=31 // pred_region
          %207 = dma.done %s200, 1024
        $region36: #{tpu_custom_call.1} parent=31 // pred_fallthru
          _
        // Predicated region
        $region37: #{tpu_custom_call.1} parent=31 // pred_check
          %p208 = pneg %p78
        $region38: #{tpu_custom_call.1} parent=31 // pred_check_branch
          %210 = sbr.rel (%p208) target = $region40
        $region39: #{tpu_custom_call.1} parent=31 // pred_region
          %211 = dma.done [#allocation6], 16
        $region40: #{tpu_custom_call.1} parent=31 // pred_fallthru
          _
        // Predicated region
        $region41: #{tpu_custom_call.1} parent=31 // pred_check
          %p212 = pneg %p99
        $region42: #{tpu_custom_call.1} parent=31 // pred_check_branch
          %214 = sbr.rel (%p212) target = $region44
        $region43: #{tpu_custom_call.1} parent=31 // pred_region
          %215 = dma.done [#allocation9], 16
        $region44: #{tpu_custom_call.1} parent=31 // pred_fallthru
          _
        %216 = sfence
        %s217 = sand.u32 %s44, 1
        %s218 = scalar_lea.sflag [#allocation4], %s217
        %s219 = sand.u32 %s44, 1
        %s220 = smul.addr %s219, 64
        %s221 = scalar_lea.vmem [#allocation3], %s220
        %p222 = pneg %p57
        %p223 = pneg %p54
        %p224 = pneg %p78
        %p225 = pneg %p75
        %p226 = pneg %p99
        %p227 = pneg %p96
        %p228 = pneg %p127
        %p229 = pneg %p124
        %s230 = sand.u32 %s114, 1
        %s231 = scalar_lea.sflag [#allocation5], %s230
        %s232 = sand.u32 %s114, 1
        %s233 = smul.addr %s232, 64
        %s234 = scalar_lea.vmem [#allocation10], %s233
        %s235 = smul.u32 4, %s27
        %s236 = smul.u32 4, %s27
        %s237 = smul.u32 %s27, 4
        %vm238 = vcmask 146432
        %239 = vst.msk [vmem:[#allocation2] sm:$0xff] %vm238, 0.0
        %240 = vst.msk [vmem:[#allocation2 + $0x8] sm:$0xff] %vm238, 0.0
        %vm241 = vcmask 140288
        %242 = vst.msk [vmem:[#allocation2 + $0x10] sm:$0x3] %vm241, 0.0
        %243 = vst.msk [vmem:[#allocation2 + $0x18] sm:$0xff] %vm238, 0.0
        %244 = vst.msk [vmem:[#allocation2 + $0x20] sm:$0xff] %vm238, 0.0
        %245 = vst.msk [vmem:[#allocation2 + $0x28] sm:$0x3] %vm241, 0.0
        %246 = vst.msk [vmem:[#allocation2 + $0x30] sm:$0xff] %vm238, 0.0
        %247 = vst.msk [vmem:[#allocation2 + $0x38] sm:$0xff] %vm238, 0.0
        %248 = vst.msk [vmem:[#allocation2 + $0x40] sm:$0x3] %vm241, 0.0
        %249 = vst.msk [vmem:[#allocation2 + $0x48] sm:$0xff] %vm238, 0.0
        %250 = vst.msk [vmem:[#allocation2 + $0x50] sm:$0xff] %vm238, 0.0
        %251 = vst.msk [vmem:[#allocation2 + $0x58] sm:$0x3] %vm241, 0.0
        %v252 = vld [vmem:[%s203] sm:$0xff]
        %v253 = vld [vmem:[%s203 + $0x8] sm:$0xff]
        %v254 = vld [vmem:[%s203 + $0x10] sm:$0xff]
        %v255 = vld [vmem:[%s203 + $0x18] sm:$0xff]
        %v256 = vld [vmem:[%s203 + $0x20] sm:$0xff]
        %v257 = vld [vmem:[%s203 + $0x28] sm:$0xff]
        %v258 = vld [vmem:[%s203 + $0x30] sm:$0xff]
        %v259 = vld [vmem:[%s203 + $0x38] sm:$0xff]
        %268 = vrot.lane.b32.xlu0 %v252, 1
        %v269 = vpop.permute.xlu0 %268
        %270 = vrot.lane.b32.xlu0 %v253, 1
        %v271 = vpop.permute.xlu0 %270
        %272 = vrot.lane.b32.xlu0 %v254, 1
        %v273 = vpop.permute.xlu0 %272
        %274 = vrot.lane.b32.xlu0 %v255, 1
        %v275 = vpop.permute.xlu0 %274
        %276 = vrot.lane.b32.xlu0 %v256, 1
        %v277 = vpop.permute.xlu0 %276
        %278 = vrot.lane.b32.xlu0 %v257, 1
        %v279 = vpop.permute.xlu0 %278
        %280 = vrot.lane.b32.xlu0 %v258, 1
        %v281 = vpop.permute.xlu0 %280
        %282 = vrot.lane.b32.xlu0 %v259, 1
        %v283 = vpop.permute.xlu0 %282
        %vm292 = vcmask 138248
        %293 = vst.msk [vmem:[#allocation2 + $0x1] sm:$0xff] %vm292, %v269
        %294 = vst.msk [vmem:[#allocation2 + $0x9] sm:$0xff] %vm292, %v271
        %295 = vst.msk [vmem:[#allocation2 + $0x19] sm:$0xff] %vm292, %v273
        %296 = vst.msk [vmem:[#allocation2 + $0x21] sm:$0xff] %vm292, %v275
        %297 = vst.msk [vmem:[#allocation2 + $0x31] sm:$0xff] %vm292, %v277
        %298 = vst.msk [vmem:[#allocation2 + $0x39] sm:$0xff] %vm292, %v279
        %299 = vst.msk [vmem:[#allocation2 + $0x49] sm:$0xff] %vm292, %v281
        %300 = vst.msk [vmem:[#allocation2 + $0x51] sm:$0xff] %vm292, %v283
        %s301 = smul.u32 %s27, 36
        %s302 = sld [smem:[#allocation7 + %s301]]
        %v303 = vld [vmem:[#allocation2] sm:$0xff]
        %v304 = vld [vmem:[#allocation2 + $0x8] sm:$0xff]
        %v305 = vstv %s302
        %v306 = vmul.f32 %v305, %v303
        %v307 = vmul.f32 %v305, %v304
        %v308 = vadd.f32 %v306, 0.0
        %v309 = vadd.f32 %v307, 0.0
        %s310 = sadd.s32 %s301, 1
        %s311 = sld [smem:[#allocation7 + %s310]]
        %v312 = vstv %s311
        %v313 = vmul.f32 %v312, %v303
        %v314 = vmul.f32 %v312, %v304
        %317 = vrot.lane.b32.xlu0 %v313, 127
        %v318 = vpop.permute.xlu0 %317
        %319 = vrot.lane.b32.xlu0 %v314, 127
        %v320 = vpop.permute.xlu0 %319
        %v323 = vadd.f32 %v308, %v318
        %v324 = vadd.f32 %v309, %v320
        %s325 = sadd.s32 %s301, 2
        %s326 = sld [smem:[#allocation7 + %s325]]
        %v327 = vstv %s326
        %v328 = vmul.f32 %v327, %v303
        %v329 = vmul.f32 %v327, %v304
        %332 = vrot.lane.b32.xlu0 %v328, 126
        %v333 = vpop.permute.xlu0 %332
        %334 = vrot.lane.b32.xlu0 %v329, 126
        %v335 = vpop.permute.xlu0 %334
        %v338 = vadd.f32 %v323, %v333
        %v339 = vadd.f32 %v324, %v335
        %s340 = sadd.s32 %s301, 3
        %s341 = sld [smem:[#allocation7 + %s340]]
        %v342 = vld [vmem:[#allocation2 + $0x1] sm:$0xff]
        %v343 = vld [vmem:[#allocation2 + $0x9] sm:$0xff]
        %v344 = vstv %s341
        %v345 = vmul.f32 %v344, %v342
        %v346 = vmul.f32 %v344, %v343
        %v347 = vadd.f32 %v338, %v345
        %v348 = vadd.f32 %v339, %v346
        %s349 = sadd.s32 %s301, 4
        %s350 = sld [smem:[#allocation7 + %s349]]
        %v351 = vstv %s350
        %v352 = vmul.f32 %v351, %v342
        %v353 = vmul.f32 %v351, %v343
        %356 = vrot.lane.b32.xlu0 %v352, 127
        %v357 = vpop.permute.xlu0 %356
        %358 = vrot.lane.b32.xlu0 %v353, 127
        %v359 = vpop.permute.xlu0 %358
        %v362 = vadd.f32 %v347, %v357
        %v363 = vadd.f32 %v348, %v359
        %s364 = sadd.s32 %s301, 5
        %s365 = sld [smem:[#allocation7 + %s364]]
        %v366 = vstv %s365
        %v367 = vmul.f32 %v366, %v342
        %v368 = vmul.f32 %v366, %v343
        %371 = vrot.lane.b32.xlu0 %v367, 126
        %v372 = vpop.permute.xlu0 %371
        %373 = vrot.lane.b32.xlu0 %v368, 126
        %v374 = vpop.permute.xlu0 %373
        %v377 = vadd.f32 %v362, %v372
        %v378 = vadd.f32 %v363, %v374
        %s379 = sadd.s32 %s301, 6
        %s380 = sld [smem:[#allocation7 + %s379]]
        %v381 = vld [vmem:[#allocation2 + $0x2] sm:$0xff]
        %v382 = vld [vmem:[#allocation2 + $0xa] sm:$0xff]
        %v383 = vstv %s380
        %v384 = vmul.f32 %v383, %v381
        %v385 = vmul.f32 %v383, %v382
        %v386 = vadd.f32 %v377, %v384
        %v387 = vadd.f32 %v378, %v385
        %s388 = sadd.s32 %s301, 7
        %s389 = sld [smem:[#allocation7 + %s388]]
        %v390 = vstv %s389
        %v391 = vmul.f32 %v390, %v381
        %v392 = vmul.f32 %v390, %v382
        %395 = vrot.lane.b32.xlu0 %v391, 127
        %v396 = vpop.permute.xlu0 %395
        %397 = vrot.lane.b32.xlu0 %v392, 127
        %v398 = vpop.permute.xlu0 %397
        %v401 = vadd.f32 %v386, %v396
        %v402 = vadd.f32 %v387, %v398
        %s403 = sadd.s32 %s301, 8
        %s404 = sld [smem:[#allocation7 + %s403]]
        %v405 = vstv %s404
        %v406 = vmul.f32 %v405, %v381
        %v407 = vmul.f32 %v405, %v382
        %410 = vrot.lane.b32.xlu0 %v406, 126
        %v411 = vpop.permute.xlu0 %410
        %412 = vrot.lane.b32.xlu0 %v407, 126
        %v413 = vpop.permute.xlu0 %412
        %v416 = vadd.f32 %v401, %v411
        %v417 = vadd.f32 %v402, %v413
        %s418 = sld [smem:[#allocation8 + %s237]]
        %v419 = vstv %s418
        %v420 = vadd.f32 %v416, %v419
        %v421 = vadd.f32 %v417, %v419
        %v422 = vsub.f32 0.0, %v420
        %v423 = vsub.f32 0.0, %v421
        %v424 = vmul.f32 %v422, 1.442695
        %v425 = vpow.pop %v424
        %v426 = vmul.f32 %v423, 1.442695
        %v427 = vpow.pop %v426
        %v428 = vadd.f32 %v425, 1.0
        %v429 = vadd.f32 %v427, 1.0
        %v430 = vrcp.pop %v428
        %v431 = vmul.f32 1.0, %v430
        %v432 = vrcp.pop %v429
        %v433 = vmul.f32 1.0, %v432
        %v434 = vld [vmem:[%s203] sm:$0xff]
        %v435 = vld [vmem:[%s203 + $0x8] sm:$0xff]
        %v436 = vmul.f32 %v434, %v431
        %v437 = vmul.f32 %v435, %v433
        %vm438 = vcmask 130048
        %439 = vst.msk [vmem:[%s234] sm:$0xff] %vm438, %v436
        %440 = vst.msk [vmem:[%s234 + $0x8] sm:$0xff] %vm438, %v437
        %s441 = sadd.s32 %s237, 1
        %s442 = smul.u32 %s441, 9
        %s443 = sld [smem:[#allocation7 + %s442]]
        %s444 = scalar_lea.vmem [#allocation2], 24
        %v445 = vld [vmem:[%s444] sm:$0xff]
        %v446 = vld [vmem:[%s444 + $0x8] sm:$0xff]
        %v447 = vstv %s443
        %v448 = vmul.f32 %v447, %v445
        %v449 = vmul.f32 %v447, %v446
        %v450 = vadd.f32 %v448, 0.0
        %v451 = vadd.f32 %v449, 0.0
        %s452 = sadd.s32 %s442, 1
        %s453 = sld [smem:[#allocation7 + %s452]]
        %v454 = vstv %s453
        %v455 = vmul.f32 %v454, %v445
        %v456 = vmul.f32 %v454, %v446
        %459 = vrot.lane.b32.xlu0 %v455, 127
        %v460 = vpop.permute.xlu0 %459
        %461 = vrot.lane.b32.xlu0 %v456, 127
        %v462 = vpop.permute.xlu0 %461
        %v465 = vadd.f32 %v450, %v460
        %v466 = vadd.f32 %v451, %v462
        %s467 = sadd.s32 %s442, 2
        %s468 = sld [smem:[#allocation7 + %s467]]
        %v469 = vstv %s468
        %v470 = vmul.f32 %v469, %v445
        %v471 = vmul.f32 %v469, %v446
        %474 = vrot.lane.b32.xlu0 %v470, 126
        %v475 = vpop.permute.xlu0 %474
        %476 = vrot.lane.b32.xlu0 %v471, 126
        %v477 = vpop.permute.xlu0 %476
        %v480 = vadd.f32 %v465, %v475
        %v481 = vadd.f32 %v466, %v477
        %s482 = sadd.s32 %s442, 3
        %s483 = sld [smem:[#allocation7 + %s482]]
        %v484 = vld [vmem:[%s444 + $0x1] sm:$0xff]
        %v485 = vld [vmem:[%s444 + $0x9] sm:$0xff]
        %v486 = vstv %s483
        %v487 = vmul.f32 %v486, %v484
        %v488 = vmul.f32 %v486, %v485
        %v489 = vadd.f32 %v480, %v487
        %v490 = vadd.f32 %v481, %v488
        %s491 = sadd.s32 %s442, 4
        %s492 = sld [smem:[#allocation7 + %s491]]
        %v493 = vstv %s492
        %v494 = vmul.f32 %v493, %v484
        %v495 = vmul.f32 %v493, %v485
        %498 = vrot.lane.b32.xlu0 %v494, 127
        %v499 = vpop.permute.xlu0 %498
        %500 = vrot.lane.b32.xlu0 %v495, 127
        %v501 = vpop.permute.xlu0 %500
        %v504 = vadd.f32 %v489, %v499
        %v505 = vadd.f32 %v490, %v501
        %s506 = sadd.s32 %s442, 5
        %s507 = sld [smem:[#allocation7 + %s506]]
        %v508 = vstv %s507
        %v509 = vmul.f32 %v508, %v484
        %v510 = vmul.f32 %v508, %v485
        %513 = vrot.lane.b32.xlu0 %v509, 126
        %v514 = vpop.permute.xlu0 %513
        %515 = vrot.lane.b32.xlu0 %v510, 126
        %v516 = vpop.permute.xlu0 %515
        %v519 = vadd.f32 %v504, %v514
        %v520 = vadd.f32 %v505, %v516
        %s521 = sadd.s32 %s442, 6
        %s522 = sld [smem:[#allocation7 + %s521]]
        %v523 = vld [vmem:[%s444 + $0x2] sm:$0xff]
        %v524 = vld [vmem:[%s444 + $0xa] sm:$0xff]
        %v525 = vstv %s522
        %v526 = vmul.f32 %v525, %v523
        %v527 = vmul.f32 %v525, %v524
        %v528 = vadd.f32 %v519, %v526
        %v529 = vadd.f32 %v520, %v527
        %s530 = sadd.s32 %s442, 7
        %s531 = sld [smem:[#allocation7 + %s530]]
        %v532 = vstv %s531
        %v533 = vmul.f32 %v532, %v523
        %v534 = vmul.f32 %v532, %v524
        %537 = vrot.lane.b32.xlu0 %v533, 127
        %v538 = vpop.permute.xlu0 %537
        %539 = vrot.lane.b32.xlu0 %v534, 127
        %v540 = vpop.permute.xlu0 %539
        %v543 = vadd.f32 %v528, %v538
        %v544 = vadd.f32 %v529, %v540
        %s545 = sadd.s32 %s442, 8
        %s546 = sld [smem:[#allocation7 + %s545]]
        %v547 = vstv %s546
        %v548 = vmul.f32 %v547, %v523
        %v549 = vmul.f32 %v547, %v524
        %552 = vrot.lane.b32.xlu0 %v548, 126
        %v553 = vpop.permute.xlu0 %552
        %554 = vrot.lane.b32.xlu0 %v549, 126
        %v555 = vpop.permute.xlu0 %554
        %v558 = vadd.f32 %v543, %v553
        %v559 = vadd.f32 %v544, %v555
        %s560 = sld [smem:[#allocation8 + %s441]]
        %v561 = vstv %s560
        %v562 = vadd.f32 %v558, %v561
        %v563 = vadd.f32 %v559, %v561
        %v564 = vsub.f32 0.0, %v562
        %v565 = vsub.f32 0.0, %v563
        %v566 = vmul.f32 %v564, 1.442695
        %v567 = vpow.pop %v566
        %v568 = vmul.f32 %v565, 1.442695
        %v569 = vpow.pop %v568
        %v570 = vadd.f32 %v567, 1.0
        %v571 = vadd.f32 %v569, 1.0
        %v572 = vrcp.pop %v570
        %v573 = vmul.f32 1.0, %v572
        %v574 = vrcp.pop %v571
        %v575 = vmul.f32 1.0, %v574
        %s576 = scalar_lea.vmem %s203, 16 [#allocation3]
        %v577 = vld [vmem:[%s576] sm:$0xff]
        %v578 = vld [vmem:[%s576 + $0x8] sm:$0xff]
        %v579 = vmul.f32 %v577, %v573
        %v580 = vmul.f32 %v578, %v575
        %s581 = scalar_lea.vmem %s234, 16 [#allocation10]
        %582 = vst.msk [vmem:[%s581] sm:$0xff] %vm438, %v579
        %583 = vst.msk [vmem:[%s581 + $0x8] sm:$0xff] %vm438, %v580
        %s584 = sadd.s32 %s237, 2
        %s585 = smul.u32 %s584, 9
        %s586 = sld [smem:[#allocation7 + %s585]]
        %s587 = scalar_lea.vmem [#allocation2], 48
        %v588 = vld [vmem:[%s587] sm:$0xff]
        %v589 = vld [vmem:[%s587 + $0x8] sm:$0xff]
        %v590 = vstv %s586
        %v591 = vmul.f32 %v590, %v588
        %v592 = vmul.f32 %v590, %v589
        %v593 = vadd.f32 %v591, 0.0
        %v594 = vadd.f32 %v592, 0.0
        %s595 = sadd.s32 %s585, 1
        %s596 = sld [smem:[#allocation7 + %s595]]
        %v597 = vstv %s596
        %v598 = vmul.f32 %v597, %v588
        %v599 = vmul.f32 %v597, %v589
        %602 = vrot.lane.b32.xlu0 %v598, 127
        %v603 = vpop.permute.xlu0 %602
        %604 = vrot.lane.b32.xlu0 %v599, 127
        %v605 = vpop.permute.xlu0 %604
        %v608 = vadd.f32 %v593, %v603
        %v609 = vadd.f32 %v594, %v605
        %s610 = sadd.s32 %s585, 2
        %s611 = sld [smem:[#allocation7 + %s610]]
        %v612 = vstv %s611
        %v613 = vmul.f32 %v612, %v588
        %v614 = vmul.f32 %v612, %v589
        %617 = vrot.lane.b32.xlu0 %v613, 126
        %v618 = vpop.permute.xlu0 %617
        %619 = vrot.lane.b32.xlu0 %v614, 126
        %v620 = vpop.permute.xlu0 %619
        %v623 = vadd.f32 %v608, %v618
        %v624 = vadd.f32 %v609, %v620
        %s625 = sadd.s32 %s585, 3
        %s626 = sld [smem:[#allocation7 + %s625]]
        %v627 = vld [vmem:[%s587 + $0x1] sm:$0xff]
        %v628 = vld [vmem:[%s587 + $0x9] sm:$0xff]
        %v629 = vstv %s626
        %v630 = vmul.f32 %v629, %v627
        %v631 = vmul.f32 %v629, %v628
        %v632 = vadd.f32 %v623, %v630
        %v633 = vadd.f32 %v624, %v631
        %s634 = sadd.s32 %s585, 4
        %s635 = sld [smem:[#allocation7 + %s634]]
        %v636 = vstv %s635
        %v637 = vmul.f32 %v636, %v627
        %v638 = vmul.f32 %v636, %v628
        %641 = vrot.lane.b32.xlu0 %v637, 127
        %v642 = vpop.permute.xlu0 %641
        %643 = vrot.lane.b32.xlu0 %v638, 127
        %v644 = vpop.permute.xlu0 %643
        %v647 = vadd.f32 %v632, %v642
        %v648 = vadd.f32 %v633, %v644
        %s649 = sadd.s32 %s585, 5
        %s650 = sld [smem:[#allocation7 + %s649]]
        %v651 = vstv %s650
        %v652 = vmul.f32 %v651, %v627
        %v653 = vmul.f32 %v651, %v628
        %656 = vrot.lane.b32.xlu0 %v652, 126
        %v657 = vpop.permute.xlu0 %656
        %658 = vrot.lane.b32.xlu0 %v653, 126
        %v659 = vpop.permute.xlu0 %658
        %v662 = vadd.f32 %v647, %v657
        %v663 = vadd.f32 %v648, %v659
        %s664 = sadd.s32 %s585, 6
        %s665 = sld [smem:[#allocation7 + %s664]]
        %v666 = vld [vmem:[%s587 + $0x2] sm:$0xff]
        %v667 = vld [vmem:[%s587 + $0xa] sm:$0xff]
        %v668 = vstv %s665
        %v669 = vmul.f32 %v668, %v666
        %v670 = vmul.f32 %v668, %v667
        %v671 = vadd.f32 %v662, %v669
        %v672 = vadd.f32 %v663, %v670
        %s673 = sadd.s32 %s585, 7
        %s674 = sld [smem:[#allocation7 + %s673]]
        %v675 = vstv %s674
        %v676 = vmul.f32 %v675, %v666
        %v677 = vmul.f32 %v675, %v667
        %680 = vrot.lane.b32.xlu0 %v676, 127
        %v681 = vpop.permute.xlu0 %680
        %682 = vrot.lane.b32.xlu0 %v677, 127
        %v683 = vpop.permute.xlu0 %682
        %v686 = vadd.f32 %v671, %v681
        %v687 = vadd.f32 %v672, %v683
        %s688 = sadd.s32 %s585, 8
        %s689 = sld [smem:[#allocation7 + %s688]]
        %v690 = vstv %s689
        %v691 = vmul.f32 %v690, %v666
        %v692 = vmul.f32 %v690, %v667
        %695 = vrot.lane.b32.xlu0 %v691, 126
        %v696 = vpop.permute.xlu0 %695
        %697 = vrot.lane.b32.xlu0 %v692, 126
        %v698 = vpop.permute.xlu0 %697
        %v701 = vadd.f32 %v686, %v696
        %v702 = vadd.f32 %v687, %v698
        %s703 = sld [smem:[#allocation8 + %s584]]
        %v704 = vstv %s703
        %v705 = vadd.f32 %v701, %v704
        %v706 = vadd.f32 %v702, %v704
        %v707 = vsub.f32 0.0, %v705
        %v708 = vsub.f32 0.0, %v706
        %v709 = vmul.f32 %v707, 1.442695
        %v710 = vpow.pop %v709
        %v711 = vmul.f32 %v708, 1.442695
        %v712 = vpow.pop %v711
        %v713 = vadd.f32 %v710, 1.0
        %v714 = vadd.f32 %v712, 1.0
        %v715 = vrcp.pop %v713
        %v716 = vmul.f32 1.0, %v715
        %v717 = vrcp.pop %v714
        %v718 = vmul.f32 1.0, %v717
        %s719 = scalar_lea.vmem %s203, 32 [#allocation3]
        %v720 = vld [vmem:[%s719] sm:$0xff]
        %v721 = vld [vmem:[%s719 + $0x8] sm:$0xff]
        %v722 = vmul.f32 %v720, %v716
        %v723 = vmul.f32 %v721, %v718
        %s724 = scalar_lea.vmem %s234, 32 [#allocation10]
        %725 = vst.msk [vmem:[%s724] sm:$0xff] %vm438, %v722
        %726 = vst.msk [vmem:[%s724 + $0x8] sm:$0xff] %vm438, %v723
        %s727 = sadd.s32 %s237, 3
        %s728 = smul.u32 %s727, 9
        %s729 = sld [smem:[#allocation7 + %s728]]
        %s730 = scalar_lea.vmem [#allocation2], 72
        %v731 = vld [vmem:[%s730] sm:$0xff]
        %v732 = vld [vmem:[%s730 + $0x8] sm:$0xff]
        %v733 = vstv %s729
        %v734 = vmul.f32 %v733, %v731
        %v735 = vmul.f32 %v733, %v732
        %v736 = vadd.f32 %v734, 0.0
        %v737 = vadd.f32 %v735, 0.0
        %s738 = sadd.s32 %s728, 1
        %s739 = sld [smem:[#allocation7 + %s738]]
        %v740 = vstv %s739
        %v741 = vmul.f32 %v740, %v731
        %v742 = vmul.f32 %v740, %v732
        %745 = vrot.lane.b32.xlu0 %v741, 127
        %v746 = vpop.permute.xlu0 %745
        %747 = vrot.lane.b32.xlu0 %v742, 127
        %v748 = vpop.permute.xlu0 %747
        %v751 = vadd.f32 %v736, %v746
        %v752 = vadd.f32 %v737, %v748
        %s753 = sadd.s32 %s728, 2
        %s754 = sld [smem:[#allocation7 + %s753]]
        %v755 = vstv %s754
        %v756 = vmul.f32 %v755, %v731
        %v757 = vmul.f32 %v755, %v732
        %760 = vrot.lane.b32.xlu0 %v756, 126
        %v761 = vpop.permute.xlu0 %760
        %762 = vrot.lane.b32.xlu0 %v757, 126
        %v763 = vpop.permute.xlu0 %762
        %v766 = vadd.f32 %v751, %v761
        %v767 = vadd.f32 %v752, %v763
        %s768 = sadd.s32 %s728, 3
        %s769 = sld [smem:[#allocation7 + %s768]]
        %v770 = vld [vmem:[%s730 + $0x1] sm:$0xff]
        %v771 = vld [vmem:[%s730 + $0x9] sm:$0xff]
        %v772 = vstv %s769
        %v773 = vmul.f32 %v772, %v770
        %v774 = vmul.f32 %v772, %v771
        %v775 = vadd.f32 %v766, %v773
        %v776 = vadd.f32 %v767, %v774
        %s777 = sadd.s32 %s728, 4
        %s778 = sld [smem:[#allocation7 + %s777]]
        %v779 = vstv %s778
        %v780 = vmul.f32 %v779, %v770
        %v781 = vmul.f32 %v779, %v771
        %784 = vrot.lane.b32.xlu0 %v780, 127
        %v785 = vpop.permute.xlu0 %784
        %786 = vrot.lane.b32.xlu0 %v781, 127
        %v787 = vpop.permute.xlu0 %786
        %v790 = vadd.f32 %v775, %v785
        %v791 = vadd.f32 %v776, %v787
        %s792 = sadd.s32 %s728, 5
        %s793 = sld [smem:[#allocation7 + %s792]]
        %v794 = vstv %s793
        %v795 = vmul.f32 %v794, %v770
        %v796 = vmul.f32 %v794, %v771
        %799 = vrot.lane.b32.xlu0 %v795, 126
        %v800 = vpop.permute.xlu0 %799
        %801 = vrot.lane.b32.xlu0 %v796, 126
        %v802 = vpop.permute.xlu0 %801
        %v805 = vadd.f32 %v790, %v800
        %v806 = vadd.f32 %v791, %v802
        %s807 = sadd.s32 %s728, 6
        %s808 = sld [smem:[#allocation7 + %s807]]
        %v809 = vld [vmem:[%s730 + $0x2] sm:$0xff]
        %v810 = vld [vmem:[%s730 + $0xa] sm:$0xff]
        %v811 = vstv %s808
        %v812 = vmul.f32 %v811, %v809
        %v813 = vmul.f32 %v811, %v810
        %v814 = vadd.f32 %v805, %v812
        %v815 = vadd.f32 %v806, %v813
        %s816 = sadd.s32 %s728, 7
        %s817 = sld [smem:[#allocation7 + %s816]]
        %v818 = vstv %s817
        %v819 = vmul.f32 %v818, %v809
        %v820 = vmul.f32 %v818, %v810
        %823 = vrot.lane.b32.xlu0 %v819, 127
        %v824 = vpop.permute.xlu0 %823
        %825 = vrot.lane.b32.xlu0 %v820, 127
        %v826 = vpop.permute.xlu0 %825
        %v829 = vadd.f32 %v814, %v824
        %v830 = vadd.f32 %v815, %v826
        %s831 = sadd.s32 %s728, 8
        %s832 = sld [smem:[#allocation7 + %s831]]
        %v833 = vstv %s832
        %v834 = vmul.f32 %v833, %v809
        %v835 = vmul.f32 %v833, %v810
        %838 = vrot.lane.b32.xlu0 %v834, 126
        %v839 = vpop.permute.xlu0 %838
        %840 = vrot.lane.b32.xlu0 %v835, 126
        %v841 = vpop.permute.xlu0 %840
        %v844 = vadd.f32 %v829, %v839
        %v845 = vadd.f32 %v830, %v841
        %s846 = sld [smem:[#allocation8 + %s727]]
        %v847 = vstv %s846
        %v848 = vadd.f32 %v844, %v847
        %v849 = vadd.f32 %v845, %v847
        %v850 = vsub.f32 0.0, %v848
        %v851 = vsub.f32 0.0, %v849
        %v852 = vmul.f32 %v850, 1.442695
        %v853 = vpow.pop %v852
        %v854 = vmul.f32 %v851, 1.442695
        %v855 = vpow.pop %v854
        %v856 = vadd.f32 %v853, 1.0
        %v857 = vadd.f32 %v855, 1.0
        %v858 = vrcp.pop %v856
        %v859 = vmul.f32 1.0, %v858
        %v860 = vrcp.pop %v857
        %v861 = vmul.f32 1.0, %v860
        %s862 = scalar_lea.vmem %s203, 48 [#allocation3]
        %v863 = vld [vmem:[%s862] sm:$0xff]
        %v864 = vld [vmem:[%s862 + $0x8] sm:$0xff]
        %v865 = vmul.f32 %v863, %v859
        %v866 = vmul.f32 %v864, %v861
        %s867 = scalar_lea.vmem %s234, 48 [#allocation10]
        %868 = vst.msk [vmem:[%s867] sm:$0xff] %vm438, %v865
        %869 = vst.msk [vmem:[%s867 + $0x8] sm:$0xff] %vm438, %v866
        %s870 = sand.u32 %s114, 1
        %s871 = scalar_lea.sflag [#allocation5], %s870
        %s872 = sand.u32 %s114, 1
        %s873 = smul.addr %s872, 64
        %s874 = scalar_lea.vmem [#allocation10], %s873
        // Predicated region
        $region45: #{tpu_custom_call.1} parent=31 // pred_check
          %p875 = pneg %p124
        $region46: #{tpu_custom_call.1} parent=31 // pred_check_branch
          %877 = sbr.rel (%p875) target = $region48
        $region47: #{tpu_custom_call.1} parent=31 // pred_region
          %s878 = smul.u32 4, %s27
          %s880 = ssub.s32 1024, 1024
          %881 = vsyncadd %s871, %s880
          %s882 = smul.addr %s878, 2
          %s883 = smul.addr %s26, 8
          %s884 = sadd.s32 %s882, %s883
          %s885 = smul.addr %s884, 128
          %s886 = scalar_lea.hbm %s3, %s885
          %s887 = sshll.u32 %s874, 4
          %s888 = int_to_ptr.vmem [resolvable:$true] %s887
          %893 = dma.vmem_to_hbm [thread:$0]  %s888, 1024, %s886, %s871, 128, 128, 8
        $region48: #{tpu_custom_call.1} parent=31 // pred_fallthru
          _
      $region32: #{tpu_custom_call.1} parent=5 // pred_fallthru
        _
      %p894 = scmp.le.s32.totalorder 2, %s17
      // Predicated region
      $region49: #{tpu_custom_call.1} parent=5 // pred_check
        %p895 = pneg %p894
      $region50: #{tpu_custom_call.1} parent=5 // pred_check_branch
        %897 = sbr.rel (%p895) target = $region52
      $region51: #{tpu_custom_call.1} parent=5 // pred_region
        %s898 = ssub.s32 %s17, 2
        // Predicated region
        $region53: #{tpu_custom_call.1} parent=51 // pred_check
          %p899 = pneg %p130
        $region54: #{tpu_custom_call.1} parent=51 // pred_check_branch
          %901 = sbr.rel (%p899) target = $region56
        $region55: #{tpu_custom_call.1} parent=51 // pred_region
          %s902 = sand.u32 %s115, 1
          %s903 = scalar_lea.sflag [#allocation5], %s902
          %s904 = sand.u32 %s115, 1
          %s905 = smul.addr %s904, 64
          %s906 = scalar_lea.vmem [#allocation10], %s905
          %907 = dma.done %s903, 1024
        $region56: #{tpu_custom_call.1} parent=51 // pred_fallthru
          _
      $region52: #{tpu_custom_call.1} parent=5 // pred_fallthru
        _
    $region6: #{tpu_custom_call.1} parent=1 // loop_footer
      %s21 = sadd.s32 1, %s17
    $region7: #{tpu_custom_call.1} parent=1 // loop_footer_branch
      %16 = sbr.rel target = $region3
    $region8: #{tpu_custom_call.1} parent=1 // loop_exit
      _
    %908 = vsyncpa [#allocation4], 1
    %s909 = scalar_lea.sflag [#allocation4], 1
    %910 = vsyncpa %s909, 1
    %911 = vsyncpa [#allocation5], 1
    %s912 = scalar_lea.sflag [#allocation5], 1
    %913 = vsyncpa %s912, 1
    %914 = vsyncpa [#allocation6], 1
    %s915 = scalar_lea.sflag [#allocation6], 1
    %916 = vsyncpa %s915, 1
    %917 = vsyncpa [#allocation9], 1

</llo_original>
